<compile_context>
chip_gen: v7x
topology: tpu7x:2x2x1
jax: 0.10.0
libtpu: 0.0.40
codegen_flags: <defaults>
</compile_context>

<pallas_src>
import jax
import jax.numpy as jnp
from jax.experimental import pallas as pl
from jax.experimental.pallas import tpu as pltpu


# ---------------------------------------------------------------------------
# helpers
# ---------------------------------------------------------------------------

def _acc_taps(load_tap, num_taps):
    """Sum load_tap(k) for k in [0, num_taps) with a short dependence chain.

    Pairs of taps are added first (independent adds the scheduler can overlap
    with the loads), then folded into one running accumulator so only a few
    slabs are live at a time.
    """
    acc = None
    k = 0
    while k + 1 < num_taps:
        pair = load_tap(k) + load_tap(k + 1)
        acc = pair if acc is None else acc + pair
        k += 2
    if k < num_taps:
        last = load_tap(k)
        acc = last if acc is None else acc + last
    return acc


def _choose_time_tile(L, K, Hb, max_rows):
    """Largest time tile <= max_rows that divides L, is a multiple of the halo
    size Hb and covers at least K taps; falls back to a single full-length tile."""
    if L <= max_rows:
        return L
    cand = (max_rows // Hb) * Hb
    lo = max(K, Hb)
    while cand >= lo:
        if L % cand == 0:
            return cand
        cand -= Hb
    # TODO(synk): for awkward L (e.g. prime) pad the time axis instead of
    # falling back to one full-length tile.
    return L


# ---------------------------------------------------------------------------
# kernels
# ---------------------------------------------------------------------------

def _make_tiled_kernel(K, pad, TL, Hb, tc):
    """Time-tiled, halo-based kernel producing the stride-1 moving average.

    x_ref:    (TL, tc)  current input time tile
    prev_ref: (Hb, tc)  rows just before the tile (clamped to tile 0 of x)
    next_ref: (Hb, tc)  rows just after  the tile (clamped to the last tile)
    o_ref:    (TL, tc)  output rows aligned with the input tile
    """
    Kb = K - 1 - pad           # taps hanging past the end of the tile
    n_int = TL - (K - 1)       # rows whose full window lies inside the tile
    inv_k = 1.0 / float(K)
    f32 = jnp.float32

    def kernel(x_ref, prev_ref, next_ref, o_ref):
        t = pl.program_id(2)
        is_first = t == 0
        is_last = t == pl.num_programs(2) - 1

        # ---- interior rows r in [pad, pad + n_int): all K taps read x_ref ----
        def load_tap(k):
            return x_ref[pl.ds(k, n_int), :].astype(f32)

        acc = _acc_taps(load_tap, K)
        o_ref[pad:pad + n_int, :] = (acc * inv_k).astype(o_ref.dtype)

        # ---- front boundary rows r in [0, pad) -------------------------------
        if pad > 0:
            x0 = x_ref[0:1, :].astype(f32)
            # valid part inside this tile: rows [0, r + K - pad)
            s_main = jnp.sum(x_ref[0:(K - pad), :].astype(f32),
                             axis=0, keepdims=True)
            # rows just before the tile: tail of prev_ref (pad - r rows)
            s_prev = jnp.sum(prev_ref[(Hb - pad):Hb, :].astype(f32),
                             axis=0, keepdims=True)
            for r in range(pad):
                if r > 0:
                    s_main = s_main + x_ref[(K - pad + r - 1):(K - pad + r),
                                            :].astype(f32)
                    s_prev = s_prev - prev_ref[(Hb - pad + r - 1):(Hb - pad + r),
                                               :].astype(f32)
                rep = float(pad - r) * x0          # edge replication of x[0]
                extra = jnp.where(is_first, rep, s_prev)
                o_ref[r:r + 1, :] = ((s_main + extra) * inv_k).astype(o_ref.dtype)

        # ---- back boundary rows r in [TL - Kb, TL) ---------------------------
        if Kb > 0:
            x_last = x_ref[(TL - 1):TL, :].astype(f32)
            r0 = TL - Kb
            # valid part inside this tile: rows [r - pad, TL)
            s_main = jnp.sum(x_ref[(r0 - pad):TL, :].astype(f32),
                             axis=0, keepdims=True)
            # rows just after the tile: head of next_ref (j + 1 rows)
            s_next = next_ref[0:1, :].astype(f32)
            for j in range(Kb):
                r = r0 + j
                if j > 0:
                    s_main = s_main - x_ref[(r - pad - 1):(r - pad), :].astype(f32)
                    s_next = s_next + next_ref[j:j + 1, :].astype(f32)
                rep = float(j + 1) * x_last        # edge replication of x[L-1]
                extra = jnp.where(is_last, rep, s_next)
                o_ref[r:r + 1, :] = ((s_main + extra) * inv_k).astype(o_ref.dtype)

    return kernel


def _make_staging_kernel(L, K, pad, tc):
    """Fallback (only used when L < K): stage the padded series in VMEM and do
    contiguous tap sums.  Produces the stride-1 moving average."""
    L_pad = L + 2 * pad
    L_s1 = L_pad - K + 1
    inv_k = 1.0 / float(K)
    f32 = jnp.float32

    def kernel(x_ref, o_ref, xp_ref):
        xp_ref[pad:pad + L, :] = x_ref[...]
        if pad > 0:
            xp_ref[0:pad, :] = jnp.broadcast_to(x_ref[0:1, :], (pad, tc))
            xp_ref[pad + L:L_pad, :] = jnp.broadcast_to(x_ref[L - 1:L, :], (pad, tc))
        acc = _acc_taps(lambda k: xp_ref[pl.ds(k, L_s1), :].astype(f32), K)
        o_ref[...] = (acc * inv_k).astype(o_ref.dtype)

    return kernel


# ---------------------------------------------------------------------------
# wrapper
# ---------------------------------------------------------------------------

def moving_avg(x, kernel_size, stride, *, time_tile=None):
    """x: (B, L, C) -> (B, L_out, C) moving average along the time axis."""
    B, L, C = x.shape
    K = int(kernel_size)
    stride = int(stride)
    assert K >= 1 and stride >= 1
    pad = (K - 1) // 2
    L_pad = L + 2 * pad
    L_out = (L_pad - K) // stride + 1
    assert L_out >= 1, "moving_avg: empty output"
    L_s1 = L_pad - K + 1                 # stride-1 moving-average length

    dtype = x.dtype
    itemsize = jnp.dtype(dtype).itemsize
    orig_C = C

    # Lane-density guard: keep channels (lane axis) a multiple of 128 so stores
    # stay unmasked full-width vst.
    if C % 128 != 0:
        c_extra = (-C) % 128
        x = jnp.pad(x, ((0, 0), (0, 0), (0, c_extra)))
        C = C + c_extra

    # Channel tile: 128 lanes; grow while a full-L block stays small (amortizes
    # the ~0.35us per-grid-step overhead for short series with many channels).
    tc = 128
    while (C % (tc * 2) == 0 and tc * 2 <= 512
           and L * tc * 2 * itemsize <= (512 << 10)):
        tc *= 2
    nCt = C // tc

    target_block_bytes = 1 << 20
    use_tiled = L >= K

    if use_tiled:
        Kb = K - 1 - pad
        Hb = 8 * ((max(pad, Kb, 1) + 7) // 8)       # halo rows (multiple of 8)
        max_rows = max(target_block_bytes // (tc * itemsize), K)
        if time_tile is None and B * nCt == 1:
            # make sure both v7x TensorCores get grid steps
            half = (L // 2 // Hb) * Hb
            if half >= K:
                max_rows = min(max_rows, half)
        if time_tile is not None:
            TL = int(time_tile)
            if not (L % TL == 0 and TL % Hb == 0 and TL >= K):
                raise ValueError(
                    "time_tile must divide L, be a multiple of the halo size "
                    f"({Hb}) and be >= kernel_size")
        else:
            TL = _choose_time_tile(L, K, Hb, int(max_rows))
        # A full-length tile whose length is not a multiple of 8 is only legal
        # when the (stride-1) output has the same length (odd K).
        if TL % 8 != 0 and not (TL == L and L_s1 == L):
            use_tiled = False

    cost = pl.CostEstimate(
        flops=B * L_s1 * C * (K + 1),
        transcendentals=0,
        bytes_accessed=(B * L * C + B * L_s1 * C) * itemsize,
    )

    if use_tiled:
        nT = L // TL
        R = TL // Hb
        last_next = max(L // Hb - 1, 0)

        est = 2 * (2 * TL + 2 * Hb) * tc * itemsize          # double-buffered blocks
        est += 6 * (TL - K + 1) * tc * 4                      # f32 intermediates
        vmem_limit = int(min(64 << 20, max(32 << 20, 2 * est)))

        kern = _make_tiled_kernel(K, pad, TL, Hb, tc)
        out_s1 = pl.pallas_call(
            kern,
            out_shape=jax.ShapeDtypeStruct((B, L_s1, C), dtype),
            grid=(B, nCt, nT),
            in_specs=[
                pl.BlockSpec((None, TL, tc), lambda b, c, t: (b, t, c)),
                pl.BlockSpec((None, Hb, tc),
                             lambda b, c, t: (b, jnp.maximum(t * R - 1, 0), c)),
                pl.BlockSpec((None, Hb, tc),
                             lambda b, c, t: (b, jnp.minimum((t + 1) * R, last_next), c)),
            ],
            out_specs=pl.BlockSpec((None, TL, tc), lambda b, c, t: (b, t, c)),
            compiler_params=pltpu.CompilerParams(
                dimension_semantics=("parallel", "parallel", "parallel"),
                vmem_limit_bytes=vmem_limit),
            cost_estimate=cost,
        )(x, x, x)
    else:
        # L < K (or an awkward single-tile shape): tiny series, staging is cheap.
        est = 2 * (L + L_s1) * tc * itemsize + (L_pad + 2 * L_s1) * tc * 4
        vmem_limit = int(min(64 << 20, max(32 << 20, 2 * est)))

        kern = _make_staging_kernel(L, K, pad, tc)
        out_s1 = pl.pallas_call(
            kern,
            out_shape=jax.ShapeDtypeStruct((B, L_s1, C), dtype),
            grid=(B, nCt),
            in_specs=[pl.BlockSpec((None, L, tc), lambda b, c: (b, 0, c))],
            out_specs=pl.BlockSpec((None, L_s1, tc), lambda b, c: (b, 0, c)),
            scratch_shapes=[pltpu.VMEM((L_pad, tc), dtype)],
            compiler_params=pltpu.CompilerParams(
                dimension_semantics=("parallel", "parallel"),
                vmem_limit_bytes=vmem_limit),
            cost_estimate=cost,
        )(x)

    out = out_s1
    if stride != 1:
        # TODO(synk): decimate inside the kernel (single strided load) to avoid
        # writing the full stride-1 series to HBM when stride > 1.
        out = out[:, ::stride, :]
    if C != orig_C:
        out = out[:, :, :orig_C]
    return out


# ---------------------------------------------------------------------------
# reference + demo
# ---------------------------------------------------------------------------

def _reference(x, kernel_size, stride):
    pad = (kernel_size - 1) // 2
    front = jnp.repeat(x[:, :1, :], pad, axis=1)
    end = jnp.repeat(x[:, -1:, :], pad, axis=1)
    xp = jnp.concatenate([front, x, end], axis=1)
    L_out = (xp.shape[1] - kernel_size) // stride + 1
    cols = [xp[:, t * stride:t * stride + kernel_size, :].mean(axis=1)
            for t in range(L_out)]
    return jnp.stack(cols, axis=1)


if __name__ == "__main__":
    key = jax.random.PRNGKey(0)

    tests = [
        # (B,  L,   C, kernel_size, stride, time_tile)
        (2, 96, 128, 25, 1, None),   # Autoformer-style decomposition, single tile
        (2, 96, 128, 25, 1, 32),     # multi-tile path: 3 time tiles + halo specs
        (2, 96, 128, 6, 1, 32),      # even kernel size (L_out = L - 1), masked tail
        (2, 32, 64, 7, 1, None),     # C < 128 -> lane-padding path
        (2, 4, 128, 7, 1, None),     # L < kernel_size -> staging fallback
    ]
    for i, (B, L, C, K, stride, tt) in enumerate(tests):
        k = jax.random.fold_in(key, i)
        x = jax.random.normal(k, (B, L, C), dtype=jnp.float32)
        out = jax.block_until_ready(moving_avg(x, K, stride, time_tile=tt))
        ref = _reference(x, K, stride)
        assert out.shape == ref.shape, (i, out.shape, ref.shape)
        assert jnp.allclose(out, ref, atol=1e-5, rtol=1e-5), f"mismatch in test {i}"

    print("KERNEL_OK")
</pallas_src>

<mosaic_0001>
module attributes {stable_mosaic.version = 11 : i64} {
  func.func @kernel(%arg0: i32, %arg1: i32, %arg2: i32, %arg3: memref<1x96x128xf32, #tpu.memory_space<vmem>>, %arg4: memref<1x16x128xf32, #tpu.memory_space<vmem>>, %arg5: memref<1x16x128xf32, #tpu.memory_space<vmem>>, %arg6: memref<1x96x128xf32, #tpu.memory_space<vmem>>) attributes {dimension_semantics = [#tpu.dimension_semantics<parallel>, #tpu.dimension_semantics<parallel>, #tpu.dimension_semantics<parallel>], iteration_bounds = array<i64: 2, 1, 1>, scalar_prefetch = 0 : i64, scratch_operands = 0 : i64, tpu.core_type = #tpu.core_type<tc>, window_params = [{transform_indices = @transform_0, window_bounds = array<i64: 1, 96, 128>}, {transform_indices = @transform_1, window_bounds = array<i64: 1, 16, 128>}, {transform_indices = @transform_2, window_bounds = array<i64: 1, 16, 128>}, {transform_indices = @transform_3, window_bounds = array<i64: 1, 96, 128>}]} {
    %c0_i32 = arith.constant 0 : i32
    %0 = arith.cmpi eq, %arg2, %c0_i32 : i32
    %c0_i32_0 = arith.constant 0 : i32
    %1 = arith.cmpi eq, %arg2, %c0_i32_0 : i32
    %c0 = arith.constant 0 : index
    %c0_1 = arith.constant 0 : index
    %c0_2 = arith.constant 0 : index
    %2 = vector.load %arg3[%c0, %c0_1, %c0_2] : memref<1x96x128xf32, #tpu.memory_space<vmem>>, vector<1x72x128xf32>
    %3 = vector.shape_cast %2 : vector<1x72x128xf32> to vector<72x128xf32>
    %c0_3 = arith.constant 0 : index
    %c1 = arith.constant 1 : index
    %c0_4 = arith.constant 0 : index
    %4 = vector.load %arg3[%c0_3, %c1, %c0_4] : memref<1x96x128xf32, #tpu.memory_space<vmem>>, vector<1x72x128xf32>
    %5 = vector.shape_cast %4 : vector<1x72x128xf32> to vector<72x128xf32>
    %6 = arith.addf %3, %5 : vector<72x128xf32>
    %c0_5 = arith.constant 0 : index
    %c2 = arith.constant 2 : index
    %c0_6 = arith.constant 0 : index
    %7 = vector.load %arg3[%c0_5, %c2, %c0_6] : memref<1x96x128xf32, #tpu.memory_space<vmem>>, vector<1x72x128xf32>
    %8 = vector.shape_cast %7 : vector<1x72x128xf32> to vector<72x128xf32>
    %c0_7 = arith.constant 0 : index
    %c3 = arith.constant 3 : index
    %c0_8 = arith.constant 0 : index
    %9 = vector.load %arg3[%c0_7, %c3, %c0_8] : memref<1x96x128xf32, #tpu.memory_space<vmem>>, vector<1x72x128xf32>
    %10 = vector.shape_cast %9 : vector<1x72x128xf32> to vector<72x128xf32>
    %11 = arith.addf %8, %10 : vector<72x128xf32>
    %12 = arith.addf %6, %11 : vector<72x128xf32>
    %c0_9 = arith.constant 0 : index
    %c4 = arith.constant 4 : index
    %c0_10 = arith.constant 0 : index
    %13 = vector.load %arg3[%c0_9, %c4, %c0_10] : memref<1x96x128xf32, #tpu.memory_space<vmem>>, vector<1x72x128xf32>
    %14 = vector.shape_cast %13 : vector<1x72x128xf32> to vector<72x128xf32>
    %c0_11 = arith.constant 0 : index
    %c5 = arith.constant 5 : index
    %c0_12 = arith.constant 0 : index
    %15 = vector.load %arg3[%c0_11, %c5, %c0_12] : memref<1x96x128xf32, #tpu.memory_space<vmem>>, vector<1x72x128xf32>
    %16 = vector.shape_cast %15 : vector<1x72x128xf32> to vector<72x128xf32>
    %17 = arith.addf %14, %16 : vector<72x128xf32>
    %18 = arith.addf %12, %17 : vector<72x128xf32>
    %c0_13 = arith.constant 0 : index
    %c6 = arith.constant 6 : index
    %c0_14 = arith.constant 0 : index
    %19 = vector.load %arg3[%c0_13, %c6, %c0_14] : memref<1x96x128xf32, #tpu.memory_space<vmem>>, vector<1x72x128xf32>
    %20 = vector.shape_cast %19 : vector<1x72x128xf32> to vector<72x128xf32>
    %c0_15 = arith.constant 0 : index
    %c7 = arith.constant 7 : index
    %c0_16 = arith.constant 0 : index
    %21 = vector.load %arg3[%c0_15, %c7, %c0_16] : memref<1x96x128xf32, #tpu.memory_space<vmem>>, vector<1x72x128xf32>
    %22 = vector.shape_cast %21 : vector<1x72x128xf32> to vector<72x128xf32>
    %23 = arith.addf %20, %22 : vector<72x128xf32>
    %24 = arith.addf %18, %23 : vector<72x128xf32>
    %c0_17 = arith.constant 0 : index
    %c8 = arith.constant 8 : index
    %c0_18 = arith.constant 0 : index
    %25 = vector.load %arg3[%c0_17, %c8, %c0_18] : memref<1x96x128xf32, #tpu.memory_space<vmem>>, vector<1x72x128xf32>
    %26 = vector.shape_cast %25 : vector<1x72x128xf32> to vector<72x128xf32>
    %c0_19 = arith.constant 0 : index
    %c9 = arith.constant 9 : index
    %c0_20 = arith.constant 0 : index
    %27 = vector.load %arg3[%c0_19, %c9, %c0_20] : memref<1x96x128xf32, #tpu.memory_space<vmem>>, vector<1x72x128xf32>
    %28 = vector.shape_cast %27 : vector<1x72x128xf32> to vector<72x128xf32>
    %29 = arith.addf %26, %28 : vector<72x128xf32>
    %30 = arith.addf %24, %29 : vector<72x128xf32>
    %c0_21 = arith.constant 0 : index
    %c10 = arith.constant 10 : index
    %c0_22 = arith.constant 0 : index
    %31 = vector.load %arg3[%c0_21, %c10, %c0_22] : memref<1x96x128xf32, #tpu.memory_space<vmem>>, vector<1x72x128xf32>
    %32 = vector.shape_cast %31 : vector<1x72x128xf32> to vector<72x128xf32>
    %c0_23 = arith.constant 0 : index
    %c11 = arith.constant 11 : index
    %c0_24 = arith.constant 0 : index
    %33 = vector.load %arg3[%c0_23, %c11, %c0_24] : memref<1x96x128xf32, #tpu.memory_space<vmem>>, vector<1x72x128xf32>
    %34 = vector.shape_cast %33 : vector<1x72x128xf32> to vector<72x128xf32>
    %35 = arith.addf %32, %34 : vector<72x128xf32>
    %36 = arith.addf %30, %35 : vector<72x128xf32>
    %c0_25 = arith.constant 0 : index
    %c12 = arith.constant 12 : index
    %c0_26 = arith.constant 0 : index
    %37 = vector.load %arg3[%c0_25, %c12, %c0_26] : memref<1x96x128xf32, #tpu.memory_space<vmem>>, vector<1x72x128xf32>
    %38 = vector.shape_cast %37 : vector<1x72x128xf32> to vector<72x128xf32>
    %c0_27 = arith.constant 0 : index
    %c13 = arith.constant 13 : index
    %c0_28 = arith.constant 0 : index
    %39 = vector.load %arg3[%c0_27, %c13, %c0_28] : memref<1x96x128xf32, #tpu.memory_space<vmem>>, vector<1x72x128xf32>
    %40 = vector.shape_cast %39 : vector<1x72x128xf32> to vector<72x128xf32>
    %41 = arith.addf %38, %40 : vector<72x128xf32>
    %42 = arith.addf %36, %41 : vector<72x128xf32>
    %c0_29 = arith.constant 0 : index
    %c14 = arith.constant 14 : index
    %c0_30 = arith.constant 0 : index
    %43 = vector.load %arg3[%c0_29, %c14, %c0_30] : memref<1x96x128xf32, #tpu.memory_space<vmem>>, vector<1x72x128xf32>
    %44 = vector.shape_cast %43 : vector<1x72x128xf32> to vector<72x128xf32>
    %c0_31 = arith.constant 0 : index
    %c15 = arith.constant 15 : index
    %c0_32 = arith.constant 0 : index
    %45 = vector.load %arg3[%c0_31, %c15, %c0_32] : memref<1x96x128xf32, #tpu.memory_space<vmem>>, vector<1x72x128xf32>
    %46 = vector.shape_cast %45 : vector<1x72x128xf32> to vector<72x128xf32>
    %47 = arith.addf %44, %46 : vector<72x128xf32>
    %48 = arith.addf %42, %47 : vector<72x128xf32>
    %c0_33 = arith.constant 0 : index
    %c16 = arith.constant 16 : index
    %c0_34 = arith.constant 0 : index
    %49 = vector.load %arg3[%c0_33, %c16, %c0_34] : memref<1x96x128xf32, #tpu.memory_space<vmem>>, vector<1x72x128xf32>
    %50 = vector.shape_cast %49 : vector<1x72x128xf32> to vector<72x128xf32>
    %c0_35 = arith.constant 0 : index
    %c17 = arith.constant 17 : index
    %c0_36 = arith.constant 0 : index
    %51 = vector.load %arg3[%c0_35, %c17, %c0_36] : memref<1x96x128xf32, #tpu.memory_space<vmem>>, vector<1x72x128xf32>
    %52 = vector.shape_cast %51 : vector<1x72x128xf32> to vector<72x128xf32>
    %53 = arith.addf %50, %52 : vector<72x128xf32>
    %54 = arith.addf %48, %53 : vector<72x128xf32>
    %c0_37 = arith.constant 0 : index
    %c18 = arith.constant 18 : index
    %c0_38 = arith.constant 0 : index
    %55 = vector.load %arg3[%c0_37, %c18, %c0_38] : memref<1x96x128xf32, #tpu.memory_space<vmem>>, vector<1x72x128xf32>
    %56 = vector.shape_cast %55 : vector<1x72x128xf32> to vector<72x128xf32>
    %c0_39 = arith.constant 0 : index
    %c19 = arith.constant 19 : index
    %c0_40 = arith.constant 0 : index
    %57 = vector.load %arg3[%c0_39, %c19, %c0_40] : memref<1x96x128xf32, #tpu.memory_space<vmem>>, vector<1x72x128xf32>
    %58 = vector.shape_cast %57 : vector<1x72x128xf32> to vector<72x128xf32>
    %59 = arith.addf %56, %58 : vector<72x128xf32>
    %60 = arith.addf %54, %59 : vector<72x128xf32>
    %c0_41 = arith.constant 0 : index
    %c20 = arith.constant 20 : index
    %c0_42 = arith.constant 0 : index
    %61 = vector.load %arg3[%c0_41, %c20, %c0_42] : memref<1x96x128xf32, #tpu.memory_space<vmem>>, vector<1x72x128xf32>
    %62 = vector.shape_cast %61 : vector<1x72x128xf32> to vector<72x128xf32>
    %c0_43 = arith.constant 0 : index
    %c21 = arith.constant 21 : index
    %c0_44 = arith.constant 0 : index
    %63 = vector.load %arg3[%c0_43, %c21, %c0_44] : memref<1x96x128xf32, #tpu.memory_space<vmem>>, vector<1x72x128xf32>
    %64 = vector.shape_cast %63 : vector<1x72x128xf32> to vector<72x128xf32>
    %65 = arith.addf %62, %64 : vector<72x128xf32>
    %66 = arith.addf %60, %65 : vector<72x128xf32>
    %c0_45 = arith.constant 0 : index
    %c22 = arith.constant 22 : index
    %c0_46 = arith.constant 0 : index
    %67 = vector.load %arg3[%c0_45, %c22, %c0_46] : memref<1x96x128xf32, #tpu.memory_space<vmem>>, vector<1x72x128xf32>
    %68 = vector.shape_cast %67 : vector<1x72x128xf32> to vector<72x128xf32>
    %c0_47 = arith.constant 0 : index
    %c23 = arith.constant 23 : index
    %c0_48 = arith.constant 0 : index
    %69 = vector.load %arg3[%c0_47, %c23, %c0_48] : memref<1x96x128xf32, #tpu.memory_space<vmem>>, vector<1x72x128xf32>
    %70 = vector.shape_cast %69 : vector<1x72x128xf32> to vector<72x128xf32>
    %71 = arith.addf %68, %70 : vector<72x128xf32>
    %72 = arith.addf %66, %71 : vector<72x128xf32>
    %c0_49 = arith.constant 0 : index
    %c24 = arith.constant 24 : index
    %c0_50 = arith.constant 0 : index
    %73 = vector.load %arg3[%c0_49, %c24, %c0_50] : memref<1x96x128xf32, #tpu.memory_space<vmem>>, vector<1x72x128xf32>
    %74 = vector.shape_cast %73 : vector<1x72x128xf32> to vector<72x128xf32>
    %75 = arith.addf %72, %74 : vector<72x128xf32>
    %cst = arith.constant 4.000000e-02 : f32
    %76 = vector.broadcast %cst : f32 to vector<72x128xf32>
    %77 = arith.mulf %75, %76 : vector<72x128xf32>
    %c0_51 = arith.constant 0 : index
    %c12_52 = arith.constant 12 : index
    %c0_53 = arith.constant 0 : index
    %78 = vector.load %arg6[%c0_51, %c12_52, %c0_53] : memref<1x96x128xf32, #tpu.memory_space<vmem>>, vector<1x72x128xf32>
    %79 = vector.shape_cast %78 : vector<1x72x128xf32> to vector<72x128xf32>
    %80 = vector.shape_cast %77 : vector<72x128xf32> to vector<1x72x128xf32>
    tpu.vector_store %arg6[%c0_51, %c12_52, %c0_53], %80 {strides = array<i32>} : memref<1x96x128xf32, #tpu.memory_space<vmem>>, vector<1x72x128xf32>,
    %c0_54 = arith.constant 0 : index
    %c0_55 = arith.constant 0 : index
    %c0_56 = arith.constant 0 : index
    %81 = vector.load %arg3[%c0_54, %c0_55, %c0_56] : memref<1x96x128xf32, #tpu.memory_space<vmem>>, vector<1x1x128xf32>
    %82 = vector.shape_cast %81 : vector<1x1x128xf32> to vector<1x128xf32>
    %c0_57 = arith.constant 0 : index
    %c0_58 = arith.constant 0 : index
    %c0_59 = arith.constant 0 : index
    %83 = vector.load %arg3[%c0_57, %c0_58, %c0_59] : memref<1x96x128xf32, #tpu.memory_space<vmem>>, vector<1x13x128xf32>
    %84 = vector.shape_cast %83 : vector<1x13x128xf32> to vector<13x128xf32>
    %cst_60 = arith.constant dense<0.000000e+00> : vector<128xf32>
    %85 = vector.multi_reduction <add>, %84, %cst_60 [0] : vector<13x128xf32> to vector<128xf32>
    %86 = vector.shape_cast %85 : vector<128xf32> to vector<1x128xf32>
    %c0_61 = arith.constant 0 : index
    %c4_62 = arith.constant 4 : index
    %c0_63 = arith.constant 0 : index
    %87 = vector.load %arg4[%c0_61, %c4_62, %c0_63] : memref<1x16x128xf32, #tpu.memory_space<vmem>>, vector<1x12x128xf32>
    %88 = vector.shape_cast %87 : vector<1x12x128xf32> to vector<12x128xf32>
    %cst_64 = arith.constant dense<0.000000e+00> : vector<128xf32>
    %89 = vector.multi_reduction <add>, %88, %cst_64 [0] : vector<12x128xf32> to vector<128xf32>
    %90 = vector.shape_cast %89 : vector<128xf32> to vector<1x128xf32>
    %cst_65 = arith.constant 1.200000e+01 : f32
    %91 = vector.broadcast %cst_65 : f32 to vector<1x128xf32>
    %92 = arith.mulf %91, %82 : vector<1x128xf32>
    %93 = arith.select %0, %92, %90 : vector<1x128xf32>
    %94 = arith.addf %86, %93 : vector<1x128xf32>
    %cst_66 = arith.constant 4.000000e-02 : f32
    %95 = vector.broadcast %cst_66 : f32 to vector<1x128xf32>
    %96 = arith.mulf %94, %95 : vector<1x128xf32>
    %c0_67 = arith.constant 0 : index
    %c0_68 = arith.constant 0 : index
    %c0_69 = arith.constant 0 : index
    %97 = vector.load %arg6[%c0_67, %c0_68, %c0_69] : memref<1x96x128xf32, #tpu.memory_space<vmem>>, vector<1x1x128xf32>
    %98 = vector.shape_cast %97 : vector<1x1x128xf32> to vector<1x128xf32>
    %99 = vector.shape_cast %96 : vector<1x128xf32> to vector<1x1x128xf32>
    tpu.vector_store %arg6[%c0_67, %c0_68, %c0_69], %99 {strides = array<i32>} : memref<1x96x128xf32, #tpu.memory_space<vmem>>, vector<1x1x128xf32>,
    %c0_70 = arith.constant 0 : index
    %c13_71 = arith.constant 13 : index
    %c0_72 = arith.constant 0 : index
    %100 = vector.load %arg3[%c0_70, %c13_71, %c0_72] : memref<1x96x128xf32, #tpu.memory_space<vmem>>, vector<1x1x128xf32>
    %101 = vector.shape_cast %100 : vector<1x1x128xf32> to vector<1x128xf32>
    %102 = arith.addf %86, %101 : vector<1x128xf32>
    %c0_73 = arith.constant 0 : index
    %c4_74 = arith.constant 4 : index
    %c0_75 = arith.constant 0 : index
    %103 = vector.load %arg4[%c0_73, %c4_74, %c0_75] : memref<1x16x128xf32, #tpu.memory_space<vmem>>, vector<1x1x128xf32>
    %104 = vector.shape_cast %103 : vector<1x1x128xf32> to vector<1x128xf32>
    %105 = arith.subf %90, %104 : vector<1x128xf32>
    %cst_76 = arith.constant 1.100000e+01 : f32
    %106 = vector.broadcast %cst_76 : f32 to vector<1x128xf32>
    %107 = arith.mulf %106, %82 : vector<1x128xf32>
    %108 = arith.select %0, %107, %105 : vector<1x128xf32>
    %109 = arith.addf %102, %108 : vector<1x128xf32>
    %cst_77 = arith.constant 4.000000e-02 : f32
    %110 = vector.broadcast %cst_77 : f32 to vector<1x128xf32>
    %111 = arith.mulf %109, %110 : vector<1x128xf32>
    %c0_78 = arith.constant 0 : index
    %c1_79 = arith.constant 1 : index
    %c0_80 = arith.constant 0 : index
    %112 = vector.load %arg6[%c0_78, %c1_79, %c0_80] : memref<1x96x128xf32, #tpu.memory_space<vmem>>, vector<1x1x128xf32>
    %113 = vector.shape_cast %112 : vector<1x1x128xf32> to vector<1x128xf32>
    %114 = vector.shape_cast %111 : vector<1x128xf32> to vector<1x1x128xf32>
    tpu.vector_store %arg6[%c0_78, %c1_79, %c0_80], %114 {strides = array<i32>} : memref<1x96x128xf32, #tpu.memory_space<vmem>>, vector<1x1x128xf32>,
    %c0_81 = arith.constant 0 : index
    %c14_82 = arith.constant 14 : index
    %c0_83 = arith.constant 0 : index
    %115 = vector.load %arg3[%c0_81, %c14_82, %c0_83] : memref<1x96x128xf32, #tpu.memory_space<vmem>>, vector<1x1x128xf32>
    %116 = vector.shape_cast %115 : vector<1x1x128xf32> to vector<1x128xf32>
    %117 = arith.addf %102, %116 : vector<1x128xf32>
    %c0_84 = arith.constant 0 : index
    %c5_85 = arith.constant 5 : index
    %c0_86 = arith.constant 0 : index
    %118 = vector.load %arg4[%c0_84, %c5_85, %c0_86] : memref<1x16x128xf32, #tpu.memory_space<vmem>>, vector<1x1x128xf32>
    %119 = vector.shape_cast %118 : vector<1x1x128xf32> to vector<1x128xf32>
    %120 = arith.subf %105, %119 : vector<1x128xf32>
    %cst_87 = arith.constant 1.000000e+01 : f32
    %121 = vector.broadcast %cst_87 : f32 to vector<1x128xf32>
    %122 = arith.mulf %121, %82 : vector<1x128xf32>
    %123 = arith.select %0, %122, %120 : vector<1x128xf32>
    %124 = arith.addf %117, %123 : vector<1x128xf32>
    %cst_88 = arith.constant 4.000000e-02 : f32
    %125 = vector.broadcast %cst_88 : f32 to vector<1x128xf32>
    %126 = arith.mulf %124, %125 : vector<1x128xf32>
    %c0_89 = arith.constant 0 : index
    %c2_90 = arith.constant 2 : index
    %c0_91 = arith.constant 0 : index
    %127 = vector.load %arg6[%c0_89, %c2_90, %c0_91] : memref<1x96x128xf32, #tpu.memory_space<vmem>>, vector<1x1x128xf32>
    %128 = vector.shape_cast %127 : vector<1x1x128xf32> to vector<1x128xf32>
    %129 = vector.shape_cast %126 : vector<1x128xf32> to vector<1x1x128xf32>
    tpu.vector_store %arg6[%c0_89, %c2_90, %c0_91], %129 {strides = array<i32>} : memref<1x96x128xf32, #tpu.memory_space<vmem>>, vector<1x1x128xf32>,
    %c0_92 = arith.constant 0 : index
    %c15_93 = arith.constant 15 : index
    %c0_94 = arith.constant 0 : index
    %130 = vector.load %arg3[%c0_92, %c15_93, %c0_94] : memref<1x96x128xf32, #tpu.memory_space<vmem>>, vector<1x1x128xf32>
    %131 = vector.shape_cast %130 : vector<1x1x128xf32> to vector<1x128xf32>
    %132 = arith.addf %117, %131 : vector<1x128xf32>
    %c0_95 = arith.constant 0 : index
    %c6_96 = arith.constant 6 : index
    %c0_97 = arith.constant 0 : index
    %133 = vector.load %arg4[%c0_95, %c6_96, %c0_97] : memref<1x16x128xf32, #tpu.memory_space<vmem>>, vector<1x1x128xf32>
    %134 = vector.shape_cast %133 : vector<1x1x128xf32> to vector<1x128xf32>
    %135 = arith.subf %120, %134 : vector<1x128xf32>
    %cst_98 = arith.constant 9.000000e+00 : f32
    %136 = vector.broadcast %cst_98 : f32 to vector<1x128xf32>
    %137 = arith.mulf %136, %82 : vector<1x128xf32>
    %138 = arith.select %0, %137, %135 : vector<1x128xf32>
    %139 = arith.addf %132, %138 : vector<1x128xf32>
    %cst_99 = arith.constant 4.000000e-02 : f32
    %140 = vector.broadcast %cst_99 : f32 to vector<1x128xf32>
    %141 = arith.mulf %139, %140 : vector<1x128xf32>
    %c0_100 = arith.constant 0 : index
    %c3_101 = arith.constant 3 : index
    %c0_102 = arith.constant 0 : index
    %142 = vector.load %arg6[%c0_100, %c3_101, %c0_102] : memref<1x96x128xf32, #tpu.memory_space<vmem>>, vector<1x1x128xf32>
    %143 = vector.shape_cast %142 : vector<1x1x128xf32> to vector<1x128xf32>
    %144 = vector.shape_cast %141 : vector<1x128xf32> to vector<1x1x128xf32>
    tpu.vector_store %arg6[%c0_100, %c3_101, %c0_102], %144 {strides = array<i32>} : memref<1x96x128xf32, #tpu.memory_space<vmem>>, vector<1x1x128xf32>,
    %c0_103 = arith.constant 0 : index
    %c16_104 = arith.constant 16 : index
    %c0_105 = arith.constant 0 : index
    %145 = vector.load %arg3[%c0_103, %c16_104, %c0_105] : memref<1x96x128xf32, #tpu.memory_space<vmem>>, vector<1x1x128xf32>
    %146 = vector.shape_cast %145 : vector<1x1x128xf32> to vector<1x128xf32>
    %147 = arith.addf %132, %146 : vector<1x128xf32>
    %c0_106 = arith.constant 0 : index
    %c7_107 = arith.constant 7 : index
    %c0_108 = arith.constant 0 : index
    %148 = vector.load %arg4[%c0_106, %c7_107, %c0_108] : memref<1x16x128xf32, #tpu.memory_space<vmem>>, vector<1x1x128xf32>
    %149 = vector.shape_cast %148 : vector<1x1x128xf32> to vector<1x128xf32>
    %150 = arith.subf %135, %149 : vector<1x128xf32>
    %cst_109 = arith.constant 8.000000e+00 : f32
    %151 = vector.broadcast %cst_109 : f32 to vector<1x128xf32>
    %152 = arith.mulf %151, %82 : vector<1x128xf32>
    %153 = arith.select %0, %152, %150 : vector<1x128xf32>
    %154 = arith.addf %147, %153 : vector<1x128xf32>
    %cst_110 = arith.constant 4.000000e-02 : f32
    %155 = vector.broadcast %cst_110 : f32 to vector<1x128xf32>
    %156 = arith.mulf %154, %155 : vector<1x128xf32>
    %c0_111 = arith.constant 0 : index
    %c4_112 = arith.constant 4 : index
    %c0_113 = arith.constant 0 : index
    %157 = vector.load %arg6[%c0_111, %c4_112, %c0_113] : memref<1x96x128xf32, #tpu.memory_space<vmem>>, vector<1x1x128xf32>
    %158 = vector.shape_cast %157 : vector<1x1x128xf32> to vector<1x128xf32>
    %159 = vector.shape_cast %156 : vector<1x128xf32> to vector<1x1x128xf32>
    tpu.vector_store %arg6[%c0_111, %c4_112, %c0_113], %159 {strides = array<i32>} : memref<1x96x128xf32, #tpu.memory_space<vmem>>, vector<1x1x128xf32>,
    %c0_114 = arith.constant 0 : index
    %c17_115 = arith.constant 17 : index
    %c0_116 = arith.constant 0 : index
    %160 = vector.load %arg3[%c0_114, %c17_115, %c0_116] : memref<1x96x128xf32, #tpu.memory_space<vmem>>, vector<1x1x128xf32>
    %161 = vector.shape_cast %160 : vector<1x1x128xf32> to vector<1x128xf32>
    %162 = arith.addf %147, %161 : vector<1x128xf32>
    %c0_117 = arith.constant 0 : index
    %c8_118 = arith.constant 8 : index
    %c0_119 = arith.constant 0 : index
    %163 = vector.load %arg4[%c0_117, %c8_118, %c0_119] : memref<1x16x128xf32, #tpu.memory_space<vmem>>, vector<1x1x128xf32>
    %164 = vector.shape_cast %163 : vector<1x1x128xf32> to vector<1x128xf32>
    %165 = arith.subf %150, %164 : vector<1x128xf32>
    %cst_120 = arith.constant 7.000000e+00 : f32
    %166 = vector.broadcast %cst_120 : f32 to vector<1x128xf32>
    %167 = arith.mulf %166, %82 : vector<1x128xf32>
    %168 = arith.select %0, %167, %165 : vector<1x128xf32>
    %169 = arith.addf %162, %168 : vector<1x128xf32>
    %cst_121 = arith.constant 4.000000e-02 : f32
    %170 = vector.broadcast %cst_121 : f32 to vector<1x128xf32>
    %171 = arith.mulf %169, %170 : vector<1x128xf32>
    %c0_122 = arith.constant 0 : index
    %c5_123 = arith.constant 5 : index
    %c0_124 = arith.constant 0 : index
    %172 = vector.load %arg6[%c0_122, %c5_123, %c0_124] : memref<1x96x128xf32, #tpu.memory_space<vmem>>, vector<1x1x128xf32>
    %173 = vector.shape_cast %172 : vector<1x1x128xf32> to vector<1x128xf32>
    %174 = vector.shape_cast %171 : vector<1x128xf32> to vector<1x1x128xf32>
    tpu.vector_store %arg6[%c0_122, %c5_123, %c0_124], %174 {strides = array<i32>} : memref<1x96x128xf32, #tpu.memory_space<vmem>>, vector<1x1x128xf32>,
    %c0_125 = arith.constant 0 : index
    %c18_126 = arith.constant 18 : index
    %c0_127 = arith.constant 0 : index
    %175 = vector.load %arg3[%c0_125, %c18_126, %c0_127] : memref<1x96x128xf32, #tpu.memory_space<vmem>>, vector<1x1x128xf32>
    %176 = vector.shape_cast %175 : vector<1x1x128xf32> to vector<1x128xf32>
    %177 = arith.addf %162, %176 : vector<1x128xf32>
    %c0_128 = arith.constant 0 : index
    %c9_129 = arith.constant 9 : index
    %c0_130 = arith.constant 0 : index
    %178 = vector.load %arg4[%c0_128, %c9_129, %c0_130] : memref<1x16x128xf32, #tpu.memory_space<vmem>>, vector<1x1x128xf32>
    %179 = vector.shape_cast %178 : vector<1x1x128xf32> to vector<1x128xf32>
    %180 = arith.subf %165, %179 : vector<1x128xf32>
    %cst_131 = arith.constant 6.000000e+00 : f32
    %181 = vector.broadcast %cst_131 : f32 to vector<1x128xf32>
    %182 = arith.mulf %181, %82 : vector<1x128xf32>
    %183 = arith.select %0, %182, %180 : vector<1x128xf32>
    %184 = arith.addf %177, %183 : vector<1x128xf32>
    %cst_132 = arith.constant 4.000000e-02 : f32
    %185 = vector.broadcast %cst_132 : f32 to vector<1x128xf32>
    %186 = arith.mulf %184, %185 : vector<1x128xf32>
    %c0_133 = arith.constant 0 : index
    %c6_134 = arith.constant 6 : index
    %c0_135 = arith.constant 0 : index
    %187 = vector.load %arg6[%c0_133, %c6_134, %c0_135] : memref<1x96x128xf32, #tpu.memory_space<vmem>>, vector<1x1x128xf32>
    %188 = vector.shape_cast %187 : vector<1x1x128xf32> to vector<1x128xf32>
    %189 = vector.shape_cast %186 : vector<1x128xf32> to vector<1x1x128xf32>
    tpu.vector_store %arg6[%c0_133, %c6_134, %c0_135], %189 {strides = array<i32>} : memref<1x96x128xf32, #tpu.memory_space<vmem>>, vector<1x1x128xf32>,
    %c0_136 = arith.constant 0 : index
    %c19_137 = arith.constant 19 : index
    %c0_138 = arith.constant 0 : index
    %190 = vector.load %arg3[%c0_136, %c19_137, %c0_138] : memref<1x96x128xf32, #tpu.memory_space<vmem>>, vector<1x1x128xf32>
    %191 = vector.shape_cast %190 : vector<1x1x128xf32> to vector<1x128xf32>
    %192 = arith.addf %177, %191 : vector<1x128xf32>
    %c0_139 = arith.constant 0 : index
    %c10_140 = arith.constant 10 : index
    %c0_141 = arith.constant 0 : index
    %193 = vector.load %arg4[%c0_139, %c10_140, %c0_141] : memref<1x16x128xf32, #tpu.memory_space<vmem>>, vector<1x1x128xf32>
    %194 = vector.shape_cast %193 : vector<1x1x128xf32> to vector<1x128xf32>
    %195 = arith.subf %180, %194 : vector<1x128xf32>
    %cst_142 = arith.constant 5.000000e+00 : f32
    %196 = vector.broadcast %cst_142 : f32 to vector<1x128xf32>
    %197 = arith.mulf %196, %82 : vector<1x128xf32>
    %198 = arith.select %0, %197, %195 : vector<1x128xf32>
    %199 = arith.addf %192, %198 : vector<1x128xf32>
    %cst_143 = arith.constant 4.000000e-02 : f32
    %200 = vector.broadcast %cst_143 : f32 to vector<1x128xf32>
    %201 = arith.mulf %199, %200 : vector<1x128xf32>
    %c0_144 = arith.constant 0 : index
    %c7_145 = arith.constant 7 : index
    %c0_146 = arith.constant 0 : index
    %202 = vector.load %arg6[%c0_144, %c7_145, %c0_146] : memref<1x96x128xf32, #tpu.memory_space<vmem>>, vector<1x1x128xf32>
    %203 = vector.shape_cast %202 : vector<1x1x128xf32> to vector<1x128xf32>
    %204 = vector.shape_cast %201 : vector<1x128xf32> to vector<1x1x128xf32>
    tpu.vector_store %arg6[%c0_144, %c7_145, %c0_146], %204 {strides = array<i32>} : memref<1x96x128xf32, #tpu.memory_space<vmem>>, vector<1x1x128xf32>,
    %c0_147 = arith.constant 0 : index
    %c20_148 = arith.constant 20 : index
    %c0_149 = arith.constant 0 : index
    %205 = vector.load %arg3[%c0_147, %c20_148, %c0_149] : memref<1x96x128xf32, #tpu.memory_space<vmem>>, vector<1x1x128xf32>
    %206 = vector.shape_cast %205 : vector<1x1x128xf32> to vector<1x128xf32>
    %207 = arith.addf %192, %206 : vector<1x128xf32>
    %c0_150 = arith.constant 0 : index
    %c11_151 = arith.constant 11 : index
    %c0_152 = arith.constant 0 : index
    %208 = vector.load %arg4[%c0_150, %c11_151, %c0_152] : memref<1x16x128xf32, #tpu.memory_space<vmem>>, vector<1x1x128xf32>
    %209 = vector.shape_cast %208 : vector<1x1x128xf32> to vector<1x128xf32>
    %210 = arith.subf %195, %209 : vector<1x128xf32>
    %cst_153 = arith.constant 4.000000e+00 : f32
    %211 = vector.broadcast %cst_153 : f32 to vector<1x128xf32>
    %212 = arith.mulf %211, %82 : vector<1x128xf32>
    %213 = arith.select %0, %212, %210 : vector<1x128xf32>
    %214 = arith.addf %207, %213 : vector<1x128xf32>
    %cst_154 = arith.constant 4.000000e-02 : f32
    %215 = vector.broadcast %cst_154 : f32 to vector<1x128xf32>
    %216 = arith.mulf %214, %215 : vector<1x128xf32>
    %c0_155 = arith.constant 0 : index
    %c8_156 = arith.constant 8 : index
    %c0_157 = arith.constant 0 : index
    %217 = vector.load %arg6[%c0_155, %c8_156, %c0_157] : memref<1x96x128xf32, #tpu.memory_space<vmem>>, vector<1x1x128xf32>
    %218 = vector.shape_cast %217 : vector<1x1x128xf32> to vector<1x128xf32>
    %219 = vector.shape_cast %216 : vector<1x128xf32> to vector<1x1x128xf32>
    tpu.vector_store %arg6[%c0_155, %c8_156, %c0_157], %219 {strides = array<i32>} : memref<1x96x128xf32, #tpu.memory_space<vmem>>, vector<1x1x128xf32>,
    %c0_158 = arith.constant 0 : index
    %c21_159 = arith.constant 21 : index
    %c0_160 = arith.constant 0 : index
    %220 = vector.load %arg3[%c0_158, %c21_159, %c0_160] : memref<1x96x128xf32, #tpu.memory_space<vmem>>, vector<1x1x128xf32>
    %221 = vector.shape_cast %220 : vector<1x1x128xf32> to vector<1x128xf32>
    %222 = arith.addf %207, %221 : vector<1x128xf32>
    %c0_161 = arith.constant 0 : index
    %c12_162 = arith.constant 12 : index
    %c0_163 = arith.constant 0 : index
    %223 = vector.load %arg4[%c0_161, %c12_162, %c0_163] : memref<1x16x128xf32, #tpu.memory_space<vmem>>, vector<1x1x128xf32>
    %224 = vector.shape_cast %223 : vector<1x1x128xf32> to vector<1x128xf32>
    %225 = arith.subf %210, %224 : vector<1x128xf32>
    %cst_164 = arith.constant 3.000000e+00 : f32
    %226 = vector.broadcast %cst_164 : f32 to vector<1x128xf32>
    %227 = arith.mulf %226, %82 : vector<1x128xf32>
    %228 = arith.select %0, %227, %225 : vector<1x128xf32>
    %229 = arith.addf %222, %228 : vector<1x128xf32>
    %cst_165 = arith.constant 4.000000e-02 : f32
    %230 = vector.broadcast %cst_165 : f32 to vector<1x128xf32>
    %231 = arith.mulf %229, %230 : vector<1x128xf32>
    %c0_166 = arith.constant 0 : index
    %c9_167 = arith.constant 9 : index
    %c0_168 = arith.constant 0 : index
    %232 = vector.load %arg6[%c0_166, %c9_167, %c0_168] : memref<1x96x128xf32, #tpu.memory_space<vmem>>, vector<1x1x128xf32>
    %233 = vector.shape_cast %232 : vector<1x1x128xf32> to vector<1x128xf32>
    %234 = vector.shape_cast %231 : vector<1x128xf32> to vector<1x1x128xf32>
    tpu.vector_store %arg6[%c0_166, %c9_167, %c0_168], %234 {strides = array<i32>} : memref<1x96x128xf32, #tpu.memory_space<vmem>>, vector<1x1x128xf32>,
    %c0_169 = arith.constant 0 : index
    %c22_170 = arith.constant 22 : index
    %c0_171 = arith.constant 0 : index
    %235 = vector.load %arg3[%c0_169, %c22_170, %c0_171] : memref<1x96x128xf32, #tpu.memory_space<vmem>>, vector<1x1x128xf32>
    %236 = vector.shape_cast %235 : vector<1x1x128xf32> to vector<1x128xf32>
    %237 = arith.addf %222, %236 : vector<1x128xf32>
    %c0_172 = arith.constant 0 : index
    %c13_173 = arith.constant 13 : index
    %c0_174 = arith.constant 0 : index
    %238 = vector.load %arg4[%c0_172, %c13_173, %c0_174] : memref<1x16x128xf32, #tpu.memory_space<vmem>>, vector<1x1x128xf32>
    %239 = vector.shape_cast %238 : vector<1x1x128xf32> to vector<1x128xf32>
    %240 = arith.subf %225, %239 : vector<1x128xf32>
    %cst_175 = arith.constant 2.000000e+00 : f32
    %241 = vector.broadcast %cst_175 : f32 to vector<1x128xf32>
    %242 = arith.mulf %241, %82 : vector<1x128xf32>
    %243 = arith.select %0, %242, %240 : vector<1x128xf32>
    %244 = arith.addf %237, %243 : vector<1x128xf32>
    %cst_176 = arith.constant 4.000000e-02 : f32
    %245 = vector.broadcast %cst_176 : f32 to vector<1x128xf32>
    %246 = arith.mulf %244, %245 : vector<1x128xf32>
    %c0_177 = arith.constant 0 : index
    %c10_178 = arith.constant 10 : index
    %c0_179 = arith.constant 0 : index
    %247 = vector.load %arg6[%c0_177, %c10_178, %c0_179] : memref<1x96x128xf32, #tpu.memory_space<vmem>>, vector<1x1x128xf32>
    %248 = vector.shape_cast %247 : vector<1x1x128xf32> to vector<1x128xf32>
    %249 = vector.shape_cast %246 : vector<1x128xf32> to vector<1x1x128xf32>
    tpu.vector_store %arg6[%c0_177, %c10_178, %c0_179], %249 {strides = array<i32>} : memref<1x96x128xf32, #tpu.memory_space<vmem>>, vector<1x1x128xf32>,
    %c0_180 = arith.constant 0 : index
    %c23_181 = arith.constant 23 : index
    %c0_182 = arith.constant 0 : index
    %250 = vector.load %arg3[%c0_180, %c23_181, %c0_182] : memref<1x96x128xf32, #tpu.memory_space<vmem>>, vector<1x1x128xf32>
    %251 = vector.shape_cast %250 : vector<1x1x128xf32> to vector<1x128xf32>
    %252 = arith.addf %237, %251 : vector<1x128xf32>
    %c0_183 = arith.constant 0 : index
    %c14_184 = arith.constant 14 : index
    %c0_185 = arith.constant 0 : index
    %253 = vector.load %arg4[%c0_183, %c14_184, %c0_185] : memref<1x16x128xf32, #tpu.memory_space<vmem>>, vector<1x1x128xf32>
    %254 = vector.shape_cast %253 : vector<1x1x128xf32> to vector<1x128xf32>
    %255 = arith.subf %240, %254 : vector<1x128xf32>
    %cst_186 = arith.constant 1.000000e+00 : f32
    %256 = vector.broadcast %cst_186 : f32 to vector<1x128xf32>
    %257 = arith.mulf %256, %82 : vector<1x128xf32>
    %258 = arith.select %0, %257, %255 : vector<1x128xf32>
    %259 = arith.addf %252, %258 : vector<1x128xf32>
    %cst_187 = arith.constant 4.000000e-02 : f32
    %260 = vector.broadcast %cst_187 : f32 to vector<1x128xf32>
    %261 = arith.mulf %259, %260 : vector<1x128xf32>
    %c0_188 = arith.constant 0 : index
    %c11_189 = arith.constant 11 : index
    %c0_190 = arith.constant 0 : index
    %262 = vector.load %arg6[%c0_188, %c11_189, %c0_190] : memref<1x96x128xf32, #tpu.memory_space<vmem>>, vector<1x1x128xf32>
    %263 = vector.shape_cast %262 : vector<1x1x128xf32> to vector<1x128xf32>
    %264 = vector.shape_cast %261 : vector<1x128xf32> to vector<1x1x128xf32>
    tpu.vector_store %arg6[%c0_188, %c11_189, %c0_190], %264 {strides = array<i32>} : memref<1x96x128xf32, #tpu.memory_space<vmem>>, vector<1x1x128xf32>,
    %c0_191 = arith.constant 0 : index
    %c95 = arith.constant 95 : index
    %c0_192 = arith.constant 0 : index
    %265 = vector.load %arg3[%c0_191, %c95, %c0_192] : memref<1x96x128xf32, #tpu.memory_space<vmem>>, vector<1x1x128xf32>
    %266 = vector.shape_cast %265 : vector<1x1x128xf32> to vector<1x128xf32>
    %c0_193 = arith.constant 0 : index
    %c72 = arith.constant 72 : index
    %c0_194 = arith.constant 0 : index
    %267 = vector.load %arg3[%c0_193, %c72, %c0_194] : memref<1x96x128xf32, #tpu.memory_space<vmem>>, vector<1x24x128xf32>
    %268 = vector.shape_cast %267 : vector<1x24x128xf32> to vector<24x128xf32>
    %cst_195 = arith.constant dense<0.000000e+00> : vector<128xf32>
    %269 = vector.multi_reduction <add>, %268, %cst_195 [0] : vector<24x128xf32> to vector<128xf32>
    %270 = vector.shape_cast %269 : vector<128xf32> to vector<1x128xf32>
    %c0_196 = arith.constant 0 : index
    %c0_197 = arith.constant 0 : index
    %c0_198 = arith.constant 0 : index
    %271 = vector.load %arg5[%c0_196, %c0_197, %c0_198] : memref<1x16x128xf32, #tpu.memory_space<vmem>>, vector<1x1x128xf32>
    %272 = vector.shape_cast %271 : vector<1x1x128xf32> to vector<1x128xf32>
    %cst_199 = arith.constant 1.000000e+00 : f32
    %273 = vector.broadcast %cst_199 : f32 to vector<1x128xf32>
    %274 = arith.mulf %273, %266 : vector<1x128xf32>
    %275 = arith.select %1, %274, %272 : vector<1x128xf32>
    %276 = arith.addf %270, %275 : vector<1x128xf32>
    %cst_200 = arith.constant 4.000000e-02 : f32
    %277 = vector.broadcast %cst_200 : f32 to vector<1x128xf32>
    %278 = arith.mulf %276, %277 : vector<1x128xf32>
    %c0_201 = arith.constant 0 : index
    %c84 = arith.constant 84 : index
    %c0_202 = arith.constant 0 : index
    %279 = vector.load %arg6[%c0_201, %c84, %c0_202] : memref<1x96x128xf32, #tpu.memory_space<vmem>>, vector<1x1x128xf32>
    %280 = vector.shape_cast %279 : vector<1x1x128xf32> to vector<1x128xf32>
    %281 = vector.shape_cast %278 : vector<1x128xf32> to vector<1x1x128xf32>
    tpu.vector_store %arg6[%c0_201, %c84, %c0_202], %281 {strides = array<i32>} : memref<1x96x128xf32, #tpu.memory_space<vmem>>, vector<1x1x128xf32>,
    %c0_203 = arith.constant 0 : index
    %c72_204 = arith.constant 72 : index
    %c0_205 = arith.constant 0 : index
    %282 = vector.load %arg3[%c0_203, %c72_204, %c0_205] : memref<1x96x128xf32, #tpu.memory_space<vmem>>, vector<1x1x128xf32>
    %283 = vector.shape_cast %282 : vector<1x1x128xf32> to vector<1x128xf32>
    %284 = arith.subf %270, %283 : vector<1x128xf32>
    %c0_206 = arith.constant 0 : index
    %c1_207 = arith.constant 1 : index
    %c0_208 = arith.constant 0 : index
    %285 = vector.load %arg5[%c0_206, %c1_207, %c0_208] : memref<1x16x128xf32, #tpu.memory_space<vmem>>, vector<1x1x128xf32>
    %286 = vector.shape_cast %285 : vector<1x1x128xf32> to vector<1x128xf32>
    %287 = arith.addf %272, %286 : vector<1x128xf32>
    %cst_209 = arith.constant 2.000000e+00 : f32
    %288 = vector.broadcast %cst_209 : f32 to vector<1x128xf32>
    %289 = arith.mulf %288, %266 : vector<1x128xf32>
    %290 = arith.select %1, %289, %287 : vector<1x128xf32>
    %291 = arith.addf %284, %290 : vector<1x128xf32>
    %cst_210 = arith.constant 4.000000e-02 : f32
    %292 = vector.broadcast %cst_210 : f32 to vector<1x128xf32>
    %293 = arith.mulf %291, %292 : vector<1x128xf32>
    %c0_211 = arith.constant 0 : index
    %c85 = arith.constant 85 : index
    %c0_212 = arith.constant 0 : index
    %294 = vector.load %arg6[%c0_211, %c85, %c0_212] : memref<1x96x128xf32, #tpu.memory_space<vmem>>, vector<1x1x128xf32>
    %295 = vector.shape_cast %294 : vector<1x1x128xf32> to vector<1x128xf32>
    %296 = vector.shape_cast %293 : vector<1x128xf32> to vector<1x1x128xf32>
    tpu.vector_store %arg6[%c0_211, %c85, %c0_212], %296 {strides = array<i32>} : memref<1x96x128xf32, #tpu.memory_space<vmem>>, vector<1x1x128xf32>,
    %c0_213 = arith.constant 0 : index
    %c73 = arith.constant 73 : index
    %c0_214 = arith.constant 0 : index
    %297 = vector.load %arg3[%c0_213, %c73, %c0_214] : memref<1x96x128xf32, #tpu.memory_space<vmem>>, vector<1x1x128xf32>
    %298 = vector.shape_cast %297 : vector<1x1x128xf32> to vector<1x128xf32>
    %299 = arith.subf %284, %298 : vector<1x128xf32>
    %c0_215 = arith.constant 0 : index
    %c2_216 = arith.constant 2 : index
    %c0_217 = arith.constant 0 : index
    %300 = vector.load %arg5[%c0_215, %c2_216, %c0_217] : memref<1x16x128xf32, #tpu.memory_space<vmem>>, vector<1x1x128xf32>
    %301 = vector.shape_cast %300 : vector<1x1x128xf32> to vector<1x128xf32>
    %302 = arith.addf %287, %301 : vector<1x128xf32>
    %cst_218 = arith.constant 3.000000e+00 : f32
    %303 = vector.broadcast %cst_218 : f32 to vector<1x128xf32>
    %304 = arith.mulf %303, %266 : vector<1x128xf32>
    %305 = arith.select %1, %304, %302 : vector<1x128xf32>
    %306 = arith.addf %299, %305 : vector<1x128xf32>
    %cst_219 = arith.constant 4.000000e-02 : f32
    %307 = vector.broadcast %cst_219 : f32 to vector<1x128xf32>
    %308 = arith.mulf %306, %307 : vector<1x128xf32>
    %c0_220 = arith.constant 0 : index
    %c86 = arith.constant 86 : index
    %c0_221 = arith.constant 0 : index
    %309 = vector.load %arg6[%c0_220, %c86, %c0_221] : memref<1x96x128xf32, #tpu.memory_space<vmem>>, vector<1x1x128xf32>
    %310 = vector.shape_cast %309 : vector<1x1x128xf32> to vector<1x128xf32>
    %311 = vector.shape_cast %308 : vector<1x128xf32> to vector<1x1x128xf32>
    tpu.vector_store %arg6[%c0_220, %c86, %c0_221], %311 {strides = array<i32>} : memref<1x96x128xf32, #tpu.memory_space<vmem>>, vector<1x1x128xf32>,
    %c0_222 = arith.constant 0 : index
    %c74 = arith.constant 74 : index
    %c0_223 = arith.constant 0 : index
    %312 = vector.load %arg3[%c0_222, %c74, %c0_223] : memref<1x96x128xf32, #tpu.memory_space<vmem>>, vector<1x1x128xf32>
    %313 = vector.shape_cast %312 : vector<1x1x128xf32> to vector<1x128xf32>
    %314 = arith.subf %299, %313 : vector<1x128xf32>
    %c0_224 = arith.constant 0 : index
    %c3_225 = arith.constant 3 : index
    %c0_226 = arith.constant 0 : index
    %315 = vector.load %arg5[%c0_224, %c3_225, %c0_226] : memref<1x16x128xf32, #tpu.memory_space<vmem>>, vector<1x1x128xf32>
    %316 = vector.shape_cast %315 : vector<1x1x128xf32> to vector<1x128xf32>
    %317 = arith.addf %302, %316 : vector<1x128xf32>
    %cst_227 = arith.constant 4.000000e+00 : f32
    %318 = vector.broadcast %cst_227 : f32 to vector<1x128xf32>
    %319 = arith.mulf %318, %266 : vector<1x128xf32>
    %320 = arith.select %1, %319, %317 : vector<1x128xf32>
    %321 = arith.addf %314, %320 : vector<1x128xf32>
    %cst_228 = arith.constant 4.000000e-02 : f32
    %322 = vector.broadcast %cst_228 : f32 to vector<1x128xf32>
    %323 = arith.mulf %321, %322 : vector<1x128xf32>
    %c0_229 = arith.constant 0 : index
    %c87 = arith.constant 87 : index
    %c0_230 = arith.constant 0 : index
    %324 = vector.load %arg6[%c0_229, %c87, %c0_230] : memref<1x96x128xf32, #tpu.memory_space<vmem>>, vector<1x1x128xf32>
    %325 = vector.shape_cast %324 : vector<1x1x128xf32> to vector<1x128xf32>
    %326 = vector.shape_cast %323 : vector<1x128xf32> to vector<1x1x128xf32>
    tpu.vector_store %arg6[%c0_229, %c87, %c0_230], %326 {strides = array<i32>} : memref<1x96x128xf32, #tpu.memory_space<vmem>>, vector<1x1x128xf32>,
    %c0_231 = arith.constant 0 : index
    %c75 = arith.constant 75 : index
    %c0_232 = arith.constant 0 : index
    %327 = vector.load %arg3[%c0_231, %c75, %c0_232] : memref<1x96x128xf32, #tpu.memory_space<vmem>>, vector<1x1x128xf32>
    %328 = vector.shape_cast %327 : vector<1x1x128xf32> to vector<1x128xf32>
    %329 = arith.subf %314, %328 : vector<1x128xf32>
    %c0_233 = arith.constant 0 : index
    %c4_234 = arith.constant 4 : index
    %c0_235 = arith.constant 0 : index
    %330 = vector.load %arg5[%c0_233, %c4_234, %c0_235] : memref<1x16x128xf32, #tpu.memory_space<vmem>>, vector<1x1x128xf32>
    %331 = vector.shape_cast %330 : vector<1x1x128xf32> to vector<1x128xf32>
    %332 = arith.addf %317, %331 : vector<1x128xf32>
    %cst_236 = arith.constant 5.000000e+00 : f32
    %333 = vector.broadcast %cst_236 : f32 to vector<1x128xf32>
    %334 = arith.mulf %333, %266 : vector<1x128xf32>
    %335 = arith.select %1, %334, %332 : vector<1x128xf32>
    %336 = arith.addf %329, %335 : vector<1x128xf32>
    %cst_237 = arith.constant 4.000000e-02 : f32
    %337 = vector.broadcast %cst_237 : f32 to vector<1x128xf32>
    %338 = arith.mulf %336, %337 : vector<1x128xf32>
    %c0_238 = arith.constant 0 : index
    %c88 = arith.constant 88 : index
    %c0_239 = arith.constant 0 : index
    %339 = vector.load %arg6[%c0_238, %c88, %c0_239] : memref<1x96x128xf32, #tpu.memory_space<vmem>>, vector<1x1x128xf32>
    %340 = vector.shape_cast %339 : vector<1x1x128xf32> to vector<1x128xf32>
    %341 = vector.shape_cast %338 : vector<1x128xf32> to vector<1x1x128xf32>
    tpu.vector_store %arg6[%c0_238, %c88, %c0_239], %341 {strides = array<i32>} : memref<1x96x128xf32, #tpu.memory_space<vmem>>, vector<1x1x128xf32>,
    %c0_240 = arith.constant 0 : index
    %c76 = arith.constant 76 : index
    %c0_241 = arith.constant 0 : index
    %342 = vector.load %arg3[%c0_240, %c76, %c0_241] : memref<1x96x128xf32, #tpu.memory_space<vmem>>, vector<1x1x128xf32>
    %343 = vector.shape_cast %342 : vector<1x1x128xf32> to vector<1x128xf32>
    %344 = arith.subf %329, %343 : vector<1x128xf32>
    %c0_242 = arith.constant 0 : index
    %c5_243 = arith.constant 5 : index
    %c0_244 = arith.constant 0 : index
    %345 = vector.load %arg5[%c0_242, %c5_243, %c0_244] : memref<1x16x128xf32, #tpu.memory_space<vmem>>, vector<1x1x128xf32>
    %346 = vector.shape_cast %345 : vector<1x1x128xf32> to vector<1x128xf32>
    %347 = arith.addf %332, %346 : vector<1x128xf32>
    %cst_245 = arith.constant 6.000000e+00 : f32
    %348 = vector.broadcast %cst_245 : f32 to vector<1x128xf32>
    %349 = arith.mulf %348, %266 : vector<1x128xf32>
    %350 = arith.select %1, %349, %347 : vector<1x128xf32>
    %351 = arith.addf %344, %350 : vector<1x128xf32>
    %cst_246 = arith.constant 4.000000e-02 : f32
    %352 = vector.broadcast %cst_246 : f32 to vector<1x128xf32>
    %353 = arith.mulf %351, %352 : vector<1x128xf32>
    %c0_247 = arith.constant 0 : index
    %c89 = arith.constant 89 : index
    %c0_248 = arith.constant 0 : index
    %354 = vector.load %arg6[%c0_247, %c89, %c0_248] : memref<1x96x128xf32, #tpu.memory_space<vmem>>, vector<1x1x128xf32>
    %355 = vector.shape_cast %354 : vector<1x1x128xf32> to vector<1x128xf32>
    %356 = vector.shape_cast %353 : vector<1x128xf32> to vector<1x1x128xf32>
    tpu.vector_store %arg6[%c0_247, %c89, %c0_248], %356 {strides = array<i32>} : memref<1x96x128xf32, #tpu.memory_space<vmem>>, vector<1x1x128xf32>,
    %c0_249 = arith.constant 0 : index
    %c77 = arith.constant 77 : index
    %c0_250 = arith.constant 0 : index
    %357 = vector.load %arg3[%c0_249, %c77, %c0_250] : memref<1x96x128xf32, #tpu.memory_space<vmem>>, vector<1x1x128xf32>
    %358 = vector.shape_cast %357 : vector<1x1x128xf32> to vector<1x128xf32>
    %359 = arith.subf %344, %358 : vector<1x128xf32>
    %c0_251 = arith.constant 0 : index
    %c6_252 = arith.constant 6 : index
    %c0_253 = arith.constant 0 : index
    %360 = vector.load %arg5[%c0_251, %c6_252, %c0_253] : memref<1x16x128xf32, #tpu.memory_space<vmem>>, vector<1x1x128xf32>
    %361 = vector.shape_cast %360 : vector<1x1x128xf32> to vector<1x128xf32>
    %362 = arith.addf %347, %361 : vector<1x128xf32>
    %cst_254 = arith.constant 7.000000e+00 : f32
    %363 = vector.broadcast %cst_254 : f32 to vector<1x128xf32>
    %364 = arith.mulf %363, %266 : vector<1x128xf32>
    %365 = arith.select %1, %364, %362 : vector<1x128xf32>
    %366 = arith.addf %359, %365 : vector<1x128xf32>
    %cst_255 = arith.constant 4.000000e-02 : f32
    %367 = vector.broadcast %cst_255 : f32 to vector<1x128xf32>
    %368 = arith.mulf %366, %367 : vector<1x128xf32>
    %c0_256 = arith.constant 0 : index
    %c90 = arith.constant 90 : index
    %c0_257 = arith.constant 0 : index
    %369 = vector.load %arg6[%c0_256, %c90, %c0_257] : memref<1x96x128xf32, #tpu.memory_space<vmem>>, vector<1x1x128xf32>
    %370 = vector.shape_cast %369 : vector<1x1x128xf32> to vector<1x128xf32>
    %371 = vector.shape_cast %368 : vector<1x128xf32> to vector<1x1x128xf32>
    tpu.vector_store %arg6[%c0_256, %c90, %c0_257], %371 {strides = array<i32>} : memref<1x96x128xf32, #tpu.memory_space<vmem>>, vector<1x1x128xf32>,
    %c0_258 = arith.constant 0 : index
    %c78 = arith.constant 78 : index
    %c0_259 = arith.constant 0 : index
    %372 = vector.load %arg3[%c0_258, %c78, %c0_259] : memref<1x96x128xf32, #tpu.memory_space<vmem>>, vector<1x1x128xf32>
    %373 = vector.shape_cast %372 : vector<1x1x128xf32> to vector<1x128xf32>
    %374 = arith.subf %359, %373 : vector<1x128xf32>
    %c0_260 = arith.constant 0 : index
    %c7_261 = arith.constant 7 : index
    %c0_262 = arith.constant 0 : index
    %375 = vector.load %arg5[%c0_260, %c7_261, %c0_262] : memref<1x16x128xf32, #tpu.memory_space<vmem>>, vector<1x1x128xf32>
    %376 = vector.shape_cast %375 : vector<1x1x128xf32> to vector<1x128xf32>
    %377 = arith.addf %362, %376 : vector<1x128xf32>
    %cst_263 = arith.constant 8.000000e+00 : f32
    %378 = vector.broadcast %cst_263 : f32 to vector<1x128xf32>
    %379 = arith.mulf %378, %266 : vector<1x128xf32>
    %380 = arith.select %1, %379, %377 : vector<1x128xf32>
    %381 = arith.addf %374, %380 : vector<1x128xf32>
    %cst_264 = arith.constant 4.000000e-02 : f32
    %382 = vector.broadcast %cst_264 : f32 to vector<1x128xf32>
    %383 = arith.mulf %381, %382 : vector<1x128xf32>
    %c0_265 = arith.constant 0 : index
    %c91 = arith.constant 91 : index
    %c0_266 = arith.constant 0 : index
    %384 = vector.load %arg6[%c0_265, %c91, %c0_266] : memref<1x96x128xf32, #tpu.memory_space<vmem>>, vector<1x1x128xf32>
    %385 = vector.shape_cast %384 : vector<1x1x128xf32> to vector<1x128xf32>
    %386 = vector.shape_cast %383 : vector<1x128xf32> to vector<1x1x128xf32>
    tpu.vector_store %arg6[%c0_265, %c91, %c0_266], %386 {strides = array<i32>} : memref<1x96x128xf32, #tpu.memory_space<vmem>>, vector<1x1x128xf32>,
    %c0_267 = arith.constant 0 : index
    %c79 = arith.constant 79 : index
    %c0_268 = arith.constant 0 : index
    %387 = vector.load %arg3[%c0_267, %c79, %c0_268] : memref<1x96x128xf32, #tpu.memory_space<vmem>>, vector<1x1x128xf32>
    %388 = vector.shape_cast %387 : vector<1x1x128xf32> to vector<1x128xf32>
    %389 = arith.subf %374, %388 : vector<1x128xf32>
    %c0_269 = arith.constant 0 : index
    %c8_270 = arith.constant 8 : index
    %c0_271 = arith.constant 0 : index
    %390 = vector.load %arg5[%c0_269, %c8_270, %c0_271] : memref<1x16x128xf32, #tpu.memory_space<vmem>>, vector<1x1x128xf32>
    %391 = vector.shape_cast %390 : vector<1x1x128xf32> to vector<1x128xf32>
    %392 = arith.addf %377, %391 : vector<1x128xf32>
    %cst_272 = arith.constant 9.000000e+00 : f32
    %393 = vector.broadcast %cst_272 : f32 to vector<1x128xf32>
    %394 = arith.mulf %393, %266 : vector<1x128xf32>
    %395 = arith.select %1, %394, %392 : vector<1x128xf32>
    %396 = arith.addf %389, %395 : vector<1x128xf32>
    %cst_273 = arith.constant 4.000000e-02 : f32
    %397 = vector.broadcast %cst_273 : f32 to vector<1x128xf32>
    %398 = arith.mulf %396, %397 : vector<1x128xf32>
    %c0_274 = arith.constant 0 : index
    %c92 = arith.constant 92 : index
    %c0_275 = arith.constant 0 : index
    %399 = vector.load %arg6[%c0_274, %c92, %c0_275] : memref<1x96x128xf32, #tpu.memory_space<vmem>>, vector<1x1x128xf32>
    %400 = vector.shape_cast %399 : vector<1x1x128xf32> to vector<1x128xf32>
    %401 = vector.shape_cast %398 : vector<1x128xf32> to vector<1x1x128xf32>
    tpu.vector_store %arg6[%c0_274, %c92, %c0_275], %401 {strides = array<i32>} : memref<1x96x128xf32, #tpu.memory_space<vmem>>, vector<1x1x128xf32>,
    %c0_276 = arith.constant 0 : index
    %c80 = arith.constant 80 : index
    %c0_277 = arith.constant 0 : index
    %402 = vector.load %arg3[%c0_276, %c80, %c0_277] : memref<1x96x128xf32, #tpu.memory_space<vmem>>, vector<1x1x128xf32>
    %403 = vector.shape_cast %402 : vector<1x1x128xf32> to vector<1x128xf32>
    %404 = arith.subf %389, %403 : vector<1x128xf32>
    %c0_278 = arith.constant 0 : index
    %c9_279 = arith.constant 9 : index
    %c0_280 = arith.constant 0 : index
    %405 = vector.load %arg5[%c0_278, %c9_279, %c0_280] : memref<1x16x128xf32, #tpu.memory_space<vmem>>, vector<1x1x128xf32>
    %406 = vector.shape_cast %405 : vector<1x1x128xf32> to vector<1x128xf32>
    %407 = arith.addf %392, %406 : vector<1x128xf32>
    %cst_281 = arith.constant 1.000000e+01 : f32
    %408 = vector.broadcast %cst_281 : f32 to vector<1x128xf32>
    %409 = arith.mulf %408, %266 : vector<1x128xf32>
    %410 = arith.select %1, %409, %407 : vector<1x128xf32>
    %411 = arith.addf %404, %410 : vector<1x128xf32>
    %cst_282 = arith.constant 4.000000e-02 : f32
    %412 = vector.broadcast %cst_282 : f32 to vector<1x128xf32>
    %413 = arith.mulf %411, %412 : vector<1x128xf32>
    %c0_283 = arith.constant 0 : index
    %c93 = arith.constant 93 : index
    %c0_284 = arith.constant 0 : index
    %414 = vector.load %arg6[%c0_283, %c93, %c0_284] : memref<1x96x128xf32, #tpu.memory_space<vmem>>, vector<1x1x128xf32>
    %415 = vector.shape_cast %414 : vector<1x1x128xf32> to vector<1x128xf32>
    %416 = vector.shape_cast %413 : vector<1x128xf32> to vector<1x1x128xf32>
    tpu.vector_store %arg6[%c0_283, %c93, %c0_284], %416 {strides = array<i32>} : memref<1x96x128xf32, #tpu.memory_space<vmem>>, vector<1x1x128xf32>,
    %c0_285 = arith.constant 0 : index
    %c81 = arith.constant 81 : index
    %c0_286 = arith.constant 0 : index
    %417 = vector.load %arg3[%c0_285, %c81, %c0_286] : memref<1x96x128xf32, #tpu.memory_space<vmem>>, vector<1x1x128xf32>
    %418 = vector.shape_cast %417 : vector<1x1x128xf32> to vector<1x128xf32>
    %419 = arith.subf %404, %418 : vector<1x128xf32>
    %c0_287 = arith.constant 0 : index
    %c10_288 = arith.constant 10 : index
    %c0_289 = arith.constant 0 : index
    %420 = vector.load %arg5[%c0_287, %c10_288, %c0_289] : memref<1x16x128xf32, #tpu.memory_space<vmem>>, vector<1x1x128xf32>
    %421 = vector.shape_cast %420 : vector<1x1x128xf32> to vector<1x128xf32>
    %422 = arith.addf %407, %421 : vector<1x128xf32>
    %cst_290 = arith.constant 1.100000e+01 : f32
    %423 = vector.broadcast %cst_290 : f32 to vector<1x128xf32>
    %424 = arith.mulf %423, %266 : vector<1x128xf32>
    %425 = arith.select %1, %424, %422 : vector<1x128xf32>
    %426 = arith.addf %419, %425 : vector<1x128xf32>
    %cst_291 = arith.constant 4.000000e-02 : f32
    %427 = vector.broadcast %cst_291 : f32 to vector<1x128xf32>
    %428 = arith.mulf %426, %427 : vector<1x128xf32>
    %c0_292 = arith.constant 0 : index
    %c94 = arith.constant 94 : index
    %c0_293 = arith.constant 0 : index
    %429 = vector.load %arg6[%c0_292, %c94, %c0_293] : memref<1x96x128xf32, #tpu.memory_space<vmem>>, vector<1x1x128xf32>
    %430 = vector.shape_cast %429 : vector<1x1x128xf32> to vector<1x128xf32>
    %431 = vector.shape_cast %428 : vector<1x128xf32> to vector<1x1x128xf32>
    tpu.vector_store %arg6[%c0_292, %c94, %c0_293], %431 {strides = array<i32>} : memref<1x96x128xf32, #tpu.memory_space<vmem>>, vector<1x1x128xf32>,
    %c0_294 = arith.constant 0 : index
    %c82 = arith.constant 82 : index
    %c0_295 = arith.constant 0 : index
    %432 = vector.load %arg3[%c0_294, %c82, %c0_295] : memref<1x96x128xf32, #tpu.memory_space<vmem>>, vector<1x1x128xf32>
    %433 = vector.shape_cast %432 : vector<1x1x128xf32> to vector<1x128xf32>
    %434 = arith.subf %419, %433 : vector<1x128xf32>
    %c0_296 = arith.constant 0 : index
    %c11_297 = arith.constant 11 : index
    %c0_298 = arith.constant 0 : index
    %435 = vector.load %arg5[%c0_296, %c11_297, %c0_298] : memref<1x16x128xf32, #tpu.memory_space<vmem>>, vector<1x1x128xf32>
    %436 = vector.shape_cast %435 : vector<1x1x128xf32> to vector<1x128xf32>
    %437 = arith.addf %422, %436 : vector<1x128xf32>
    %cst_299 = arith.constant 1.200000e+01 : f32
    %438 = vector.broadcast %cst_299 : f32 to vector<1x128xf32>
    %439 = arith.mulf %438, %266 : vector<1x128xf32>
    %440 = arith.select %1, %439, %437 : vector<1x128xf32>
    %441 = arith.addf %434, %440 : vector<1x128xf32>
    %cst_300 = arith.constant 4.000000e-02 : f32
    %442 = vector.broadcast %cst_300 : f32 to vector<1x128xf32>
    %443 = arith.mulf %441, %442 : vector<1x128xf32>
    %c0_301 = arith.constant 0 : index
    %c95_302 = arith.constant 95 : index
    %c0_303 = arith.constant 0 : index
    %444 = vector.load %arg6[%c0_301, %c95_302, %c0_303] : memref<1x96x128xf32, #tpu.memory_space<vmem>>, vector<1x1x128xf32>
    %445 = vector.shape_cast %444 : vector<1x1x128xf32> to vector<1x128xf32>
    %446 = vector.shape_cast %443 : vector<1x128xf32> to vector<1x1x128xf32>
    tpu.vector_store %arg6[%c0_301, %c95_302, %c0_303], %446 {strides = array<i32>} : memref<1x96x128xf32, #tpu.memory_space<vmem>>, vector<1x1x128xf32>,
    return
  }
  func.func @transform_0(%arg0: i32, %arg1: i32, %arg2: i32) -> (i32, i32, i32) {
    %c0_i32 = arith.constant 0 : i32
    return %arg0, %arg2, %arg1 : i32, i32, i32
  }
  func.func @transform_1(%arg0: i32, %arg1: i32, %arg2: i32) -> (i32, i32, i32) {
    %c6_i32 = arith.constant 6 : i32
    %0 = arith.muli %arg2, %c6_i32 : i32
    %c1_i32 = arith.constant 1 : i32
    %1 = arith.subi %0, %c1_i32 : i32
    %c0_i32 = arith.constant 0 : i32
    %2 = arith.maxsi %1, %c0_i32 : i32
    %c0_i32_0 = arith.constant 0 : i32
    return %arg0, %2, %arg1 : i32, i32, i32
  }
  func.func @transform_2(%arg0: i32, %arg1: i32, %arg2: i32) -> (i32, i32, i32) {
    %c1_i32 = arith.constant 1 : i32
    %0 = arith.addi %arg2, %c1_i32 : i32
    %c6_i32 = arith.constant 6 : i32
    %1 = arith.muli %0, %c6_i32 : i32
    %c5_i32 = arith.constant 5 : i32
    %2 = arith.minsi %1, %c5_i32 : i32
    %c0_i32 = arith.constant 0 : i32
    return %arg0, %2, %arg1 : i32, i32, i32
  }
  func.func @transform_3(%arg0: i32, %arg1: i32, %arg2: i32) -> (i32, i32, i32) {
    %c0_i32 = arith.constant 0 : i32
    return %arg0, %arg2, %arg1 : i32, i32, i32
  }
}

</mosaic_0001>

<llo_original>
// kernel: tpu_custom_call.1
$region0: #{tpu_custom_call.1}
  #allocation0 [shape = 'u32[]', space=smem, size = 0x4, offset = 0x4, fixed_abs, tag = 'smem constant byte address 0x4 - core index']
  #allocation1 [shape = 'u32[144,128]{1,0:T(1,128)}', space=vmem, size = 0x12000, scoped, tag = 'internal scratch']
  %s0 = inlined_call_operand.hbm [shape: f32[2,96,128], index: 0, kind: input, shape index: {}]
  %s1 = inlined_call_operand.hbm [shape: f32[2,96,128], index: 1, kind: input, shape index: {}]
  %s2 = inlined_call_operand.hbm [shape: f32[2,96,128], index: 2, kind: input, shape index: {}]
  %s3 = inlined_call_operand.hbm [shape: f32[2,96,128], index: 3, kind: output, shape index: {}]
  %s4 = sld [smem:[#allocation0]]
  $region57: #{tpu_custom_call.1} parent=0
    _
  %s6 = ssub.s32 1, %s4
  %s7 = scalar_select 0, %s6, %s4
  $region1: #{tpu_custom_call.1} parent=0
    #allocation2 [shape = 'u8[98304]{0}', space=vmem, size = 0x18000, scoped, tag = 'input window, operand 0']
    #allocation3 [shape = 's32[2]{0}', space=sflag, size = 0x8, scoped, tag = 'scoped memory for tpu_custom_call.1']
    #allocation4 [shape = 's32[2]{0}', space=sflag, size = 0x8, scoped, tag = 'scoped memory for tpu_custom_call.1']
    #allocation5 [shape = 'u8[16384]{0}', space=vmem, size = 0x4000, scoped, tag = 'input window, operand 1']
    #allocation6 [shape = 's32[2]{0}', space=sflag, size = 0x8, scoped, tag = 'scoped memory for tpu_custom_call.1']
    #allocation7 [shape = 'u8[16384]{0}', space=vmem, size = 0x4000, scoped, tag = 'input window, operand 2']
    #allocation8 [shape = 'u8[98304]{0}', space=vmem, size = 0x18000, scoped, tag = 'output window, operand 0']
    %8 = vsyncpa [#allocation3], 0
    %s9 = scalar_lea.sflag [#allocation3], 1
    %10 = vsyncpa %s9, 0
    %11 = vsyncpa [#allocation6], 0
    %s12 = scalar_lea.sflag [#allocation6], 1
    %13 = vsyncpa %s12, 0
    %14 = vsyncpa [#allocation4], 0
    %s15 = scalar_lea.sflag [#allocation4], 1
    %16 = vsyncpa %s15, 0
    loop: start=0, step=1, limit=4
    $region2: #{tpu_custom_call.1} parent=1 // loop_pre_header
      _
    $region3: #{tpu_custom_call.1} parent=1 // loop_header
      %s18 = sphi 0, %s22
      %p19 = scmp.ge.s32.totalorder %s18, 4
      %s25 = sphi 0, %s44
      %s26 = sphi 0, %s40
      %s27 = sphi 0, %s36
      %s28 = sphi 0, %s25
      %s29 = sphi 0, %s26
      %s30 = sphi 0, %s27
      %s31 = sphi 0, %s28
      %s32 = sphi 0, %s29
      %s33 = sphi 0, %s30
      %s51 = sphi 0, %s53
      %s54 = sphi 0, %s51
      %s55 = sphi 0, %s54
      %s71 = sphi 0, %s55
      %s89 = sphi 0, %s91
      %s92 = sphi 0, %s89
      %s93 = sphi 0, %s92
      %s109 = sphi 0, %s93
      %s127 = sphi 0, %s129
      %s130 = sphi 0, %s127
      %s131 = sphi 0, %s130
      %s147 = sphi 0, %s131
      %s157 = sphi 0, %s159
      %s160 = sphi 0, %s157
      %s161 = sphi 0, %s160
      %s177 = sphi 0, %s161
    $region4: #{tpu_custom_call.1} parent=1 // loop_header_branch
      %21 = sbr.rel (%p19) target = $region8
    $region5: #{tpu_custom_call.1} parent=1 // loop_body
      %s23 = ssub.s32 %s18, 1
      %s24 = ssub.s32 %s18, 2
      %s34 = sadd.s32 1, %s27
      %p35 = scmp.ge.s32.totalorder %s34, 1
      %s36 = scalar_select %p35, 0, %s34
      %s37 = sadd.s32 1, %s26
      %s38 = scalar_select %p35, %s37, %s26
      %p39 = scmp.ge.s32.totalorder %s38, 1
      %s40 = scalar_select %p39, 0, %s38
      %s41 = sadd.s32 1, %s25
      %s42 = scalar_select %p39, %s41, %s25
      %p43 = scmp.ge.s32.totalorder %s42, 2
      %s44 = scalar_select %p43, 0, %s42
      %s45 = ssub.s32 %s25, %s44
      %s46 = ssub.s32 %s27, %s36
      %s47 = sor.u32 %s45, %s46
      %s48 = ssub.s32 %s26, %s40
      %s49 = sor.u32 %s47, %s48
      %p50 = scmp.eq.s32.totalorder %s49, 0
      %s52 = sadd.s32 %s51, 1
      %s53 = scalar_select %p50, %s51, %s52
      %p56 = pneg %p50
      %p57 = scmp.eq.s32.totalorder %s18, 1
      %p58 = por %p56, %p57
      %p59 = scmp.ne.s32.totalorder %s51, %s54
      %p60 = scmp.eq.s32.totalorder %s18, 0
      %p61 = por %p59, %p60
      %p62 = scmp.ne.s32.totalorder %s51, %s54
      %p63 = scmp.eq.s32.totalorder %s23, 1
      %p64 = por %p62, %p63
      %p65 = scmp.ne.s32.totalorder %s54, %s55
      %p66 = scmp.eq.s32.totalorder %s23, 0
      %p67 = por %p65, %p66
      %p68 = scmp.ne.s32.totalorder %s54, %s55
      %p69 = scmp.eq.s32.totalorder %s24, 1
      %p70 = por %p68, %p69
      %p72 = scmp.ne.s32.totalorder %s55, %s71
      %p73 = scmp.eq.s32.totalorder %s24, 0
      %p74 = por %p72, %p73
      %s75 = smul.u32 %s27, 6
      %s76 = ssub.s32 %s75, 1
      %p77 = scmp.gt.s32.totalorder %s76, 0
      %s78 = scalar_select %p77, %s76, 0
      %s79 = smul.u32 %s36, 6
      %s80 = ssub.s32 %s79, 1
      %p81 = scmp.gt.s32.totalorder %s80, 0
      %s82 = scalar_select %p81, %s80, 0
      %s83 = ssub.s32 %s25, %s44
      %s84 = ssub.s32 %s78, %s82
      %s85 = sor.u32 %s83, %s84
      %s86 = ssub.s32 %s26, %s40
      %s87 = sor.u32 %s85, %s86
      %p88 = scmp.eq.s32.totalorder %s87, 0
      %s90 = sadd.s32 %s89, 1
      %s91 = scalar_select %p88, %s89, %s90
      %p94 = pneg %p88
      %p95 = scmp.eq.s32.totalorder %s18, 1
      %p96 = por %p94, %p95
      %p97 = scmp.ne.s32.totalorder %s89, %s92
      %p98 = scmp.eq.s32.totalorder %s18, 0
      %p99 = por %p97, %p98
      %p100 = scmp.ne.s32.totalorder %s89, %s92
      %p101 = scmp.eq.s32.totalorder %s23, 1
      %p102 = por %p100, %p101
      %p103 = scmp.ne.s32.totalorder %s92, %s93
      %p104 = scmp.eq.s32.totalorder %s23, 0
      %p105 = por %p103, %p104
      %p106 = scmp.ne.s32.totalorder %s92, %s93
      %p107 = scmp.eq.s32.totalorder %s24, 1
      %p108 = por %p106, %p107
      %p110 = scmp.ne.s32.totalorder %s93, %s109
      %p111 = scmp.eq.s32.totalorder %s24, 0
      %p112 = por %p110, %p111
      %s113 = sadd.s32 %s27, 1
      %s114 = smul.u32 %s113, 6
      %p115 = scmp.lt.s32.totalorder %s114, 5
      %s116 = scalar_select %p115, %s114, 5
      %s117 = sadd.s32 %s36, 1
      %s118 = smul.u32 %s117, 6
      %p119 = scmp.lt.s32.totalorder %s118, 5
      %s120 = scalar_select %p119, %s118, 5
      %s121 = ssub.s32 %s25, %s44
      %s122 = ssub.s32 %s116, %s120
      %s123 = sor.u32 %s121, %s122
      %s124 = ssub.s32 %s26, %s40
      %s125 = sor.u32 %s123, %s124
      %p126 = scmp.eq.s32.totalorder %s125, 0
      %s128 = sadd.s32 %s127, 1
      %s129 = scalar_select %p126, %s127, %s128
      %p132 = pneg %p126
      %p133 = scmp.eq.s32.totalorder %s18, 1
      %p134 = por %p132, %p133
      %p135 = scmp.ne.s32.totalorder %s127, %s130
      %p136 = scmp.eq.s32.totalorder %s18, 0
      %p137 = por %p135, %p136
      %p138 = scmp.ne.s32.totalorder %s127, %s130
      %p139 = scmp.eq.s32.totalorder %s23, 1
      %p140 = por %p138, %p139
      %p141 = scmp.ne.s32.totalorder %s130, %s131
      %p142 = scmp.eq.s32.totalorder %s23, 0
      %p143 = por %p141, %p142
      %p144 = scmp.ne.s32.totalorder %s130, %s131
      %p145 = scmp.eq.s32.totalorder %s24, 1
      %p146 = por %p144, %p145
      %p148 = scmp.ne.s32.totalorder %s131, %s147
      %p149 = scmp.eq.s32.totalorder %s24, 0
      %p150 = por %p148, %p149
      %s151 = ssub.s32 %s25, %s44
      %s152 = ssub.s32 %s27, %s36
      %s153 = sor.u32 %s151, %s152
      %s154 = ssub.s32 %s26, %s40
      %s155 = sor.u32 %s153, %s154
      %p156 = scmp.eq.s32.totalorder %s155, 0
      %s158 = sadd.s32 %s157, 1
      %s159 = scalar_select %p156, %s157, %s158
      %p162 = pneg %p156
      %p163 = scmp.eq.s32.totalorder %s18, 1
      %p164 = por %p162, %p163
      %p165 = scmp.ne.s32.totalorder %s157, %s160
      %p166 = scmp.eq.s32.totalorder %s18, 0
      %p167 = por %p165, %p166
      %p168 = scmp.ne.s32.totalorder %s157, %s160
      %p169 = scmp.eq.s32.totalorder %s23, 1
      %p170 = por %p168, %p169
      %p171 = scmp.ne.s32.totalorder %s160, %s161
      %p172 = scmp.eq.s32.totalorder %s23, 0
      %p173 = por %p171, %p172
      %p174 = scmp.ne.s32.totalorder %s160, %s161
      %p175 = scmp.eq.s32.totalorder %s24, 1
      %p176 = por %p174, %p175
      %p178 = scmp.ne.s32.totalorder %s161, %s177
      %p179 = scmp.eq.s32.totalorder %s24, 0
      %p180 = por %p178, %p179
      %p181 = scmp.le.s32.totalorder 1, %s18
      %p182 = scmp.lt.s32.totalorder %s18, 3
      %p183 = pnand %p181, %p182
      %p184 = pneg %p183
      // Predicated region
      $region9: #{tpu_custom_call.1} parent=5 // pred_check
        _
      $region10: #{tpu_custom_call.1} parent=5 // pred_check_branch
        %186 = sbr.rel (%p183) target = $region12
      $region11: #{tpu_custom_call.1} parent=5 // pred_region
        %s187 = ssub.s32 %s18, 1
      $region12: #{tpu_custom_call.1} parent=5 // pred_fallthru
        _
      %p188 = scmp.lt.s32.totalorder %s18, 2
      // Predicated region
      $region13: #{tpu_custom_call.1} parent=5 // pred_check
        %p189 = pneg %p188
      $region14: #{tpu_custom_call.1} parent=5 // pred_check_branch
        %191 = sbr.rel (%p189) target = $region16
      $region15: #{tpu_custom_call.1} parent=5 // pred_region
        // Predicated region
        $region17: #{tpu_custom_call.1} parent=15 // pred_check
          %p192 = pneg %p61
        $region18: #{tpu_custom_call.1} parent=15 // pred_check_branch
          %194 = sbr.rel (%p192) target = $region20
        $region19: #{tpu_custom_call.1} parent=15 // pred_region
          %s195 = sand.u32 %s51, 1
          %s196 = scalar_lea.sflag [#allocation3], %s195
          %s197 = sand.u32 %s51, 1
          %s198 = smul.addr %s197, 96
          %s199 = scalar_lea.vmem [#allocation2], %s198
          %s200 = smul.u32 12, %s27
          %s202 = ssub.s32 1536, 1536
          %203 = vsyncadd %s196, %s202
          %s204 = sadd.s32 %s26, %s200
          %s205 = smul.addr %s25, 12
          %s206 = sadd.s32 %s204, %s205
          %s207 = smul.addr %s206, 128
          %s208 = scalar_lea.hbm %s0, %s207
          %s209 = sshll.u32 %s199, 4
          %s210 = int_to_ptr.vmem [resolvable:$true] %s209
          %215 = dma.hbm_to_vmem [thread:$0]  %s208, 1536, %s210, %s196, 128, 128, 8
        $region20: #{tpu_custom_call.1} parent=15 // pred_fallthru
          _
        // Predicated region
        $region21: #{tpu_custom_call.1} parent=15 // pred_check
          %p216 = pneg %p99
        $region22: #{tpu_custom_call.1} parent=15 // pred_check_branch
          %218 = sbr.rel (%p216) target = $region24
        $region23: #{tpu_custom_call.1} parent=15 // pred_region
          %s219 = sand.u32 %s18, 1
          %s220 = scalar_lea.sflag [#allocation6], %s219
          %s221 = sand.u32 %s89, 1
          %s222 = smul.addr %s221, 16
          %s223 = scalar_lea.vmem [#allocation5], %s222
          %s224 = smul.u32 %s27, 6
          %s225 = ssub.s32 %s224, 1
          %p226 = scmp.gt.s32.totalorder %s225, 0
          %s227 = scalar_select %p226, %s225, 0
          %s228 = smul.u32 2, %s227
          %s230 = ssub.s32 256, 256
          %231 = vsyncadd %s220, %s230
          %s232 = sadd.s32 %s26, %s228
          %s233 = smul.addr %s25, 12
          %s234 = sadd.s32 %s232, %s233
          %s235 = smul.addr %s234, 128
          %s236 = scalar_lea.hbm %s1, %s235
          %s237 = sshll.u32 %s223, 4
          %s238 = int_to_ptr.vmem [resolvable:$true] %s237
          %243 = dma.hbm_to_vmem [thread:$0]  %s236, 256, %s238, %s220, 128, 128, 8
        $region24: #{tpu_custom_call.1} parent=15 // pred_fallthru
          _
        // Predicated region
        $region25: #{tpu_custom_call.1} parent=15 // pred_check
          %p244 = pneg %p137
        $region26: #{tpu_custom_call.1} parent=15 // pred_check_branch
          %246 = sbr.rel (%p244) target = $region28
        $region27: #{tpu_custom_call.1} parent=15 // pred_region
          %s247 = sand.u32 %s18, 1
          %s248 = scalar_lea.sflag [#allocation6], %s247
          %s249 = sand.u32 %s127, 1
          %s250 = smul.addr %s249, 16
          %s251 = scalar_lea.vmem [#allocation7], %s250
          %s252 = sadd.s32 %s27, 1
          %s253 = smul.u32 %s252, 6
          %p254 = scmp.lt.s32.totalorder %s253, 5
          %s255 = scalar_select %p254, %s253, 5
          %s256 = smul.u32 2, %s255
          %s258 = ssub.s32 256, 256
          %259 = vsyncadd %s248, %s258
          %s260 = sadd.s32 %s26, %s256
          %s261 = smul.addr %s25, 12
          %s262 = sadd.s32 %s260, %s261
          %s263 = smul.addr %s262, 128
          %s264 = scalar_lea.hbm %s2, %s263
          %s265 = sshll.u32 %s251, 4
          %s266 = int_to_ptr.vmem [resolvable:$true] %s265
          %271 = dma.hbm_to_vmem [thread:$0]  %s264, 256, %s266, %s248, 128, 128, 8
        $region28: #{tpu_custom_call.1} parent=15 // pred_fallthru
          _
      $region16: #{tpu_custom_call.1} parent=5 // pred_fallthru
        _
      %p272 = scmp.le.s32.totalorder 1, %s18
      %p273 = scmp.lt.s32.totalorder %s18, 3
      %p274 = pnand %p272, %p273
      %p275 = pneg %p274
      // Predicated region
      $region29: #{tpu_custom_call.1} parent=5 // pred_check
        _
      $region30: #{tpu_custom_call.1} parent=5 // pred_check_branch
        %277 = sbr.rel (%p274) target = $region32
      $region31: #{tpu_custom_call.1} parent=5 // pred_region
        %s278 = ssub.s32 %s18, 1
        %s279 = sand.u32 %s54, 1
        %s280 = scalar_lea.sflag [#allocation3], %s279
        %s281 = sand.u32 %s54, 1
        %s282 = smul.addr %s281, 96
        %s283 = scalar_lea.vmem [#allocation2], %s282
        // Predicated region
        $region33: #{tpu_custom_call.1} parent=31 // pred_check
          %p284 = pneg %p67
        $region34: #{tpu_custom_call.1} parent=31 // pred_check_branch
          %286 = sbr.rel (%p284) target = $region36
        $region35: #{tpu_custom_call.1} parent=31 // pred_region
          %287 = dma.done %s280, 1536
        $region36: #{tpu_custom_call.1} parent=31 // pred_fallthru
          _
        %s288 = sand.u32 %s23, 1
        %s289 = scalar_lea.sflag [#allocation6], %s288
        %s290 = sand.u32 %s92, 1
        %s291 = smul.addr %s290, 16
        %s292 = scalar_lea.vmem [#allocation5], %s291
        // Predicated region
        $region37: #{tpu_custom_call.1} parent=31 // pred_check
          %p293 = pneg %p105
        $region38: #{tpu_custom_call.1} parent=31 // pred_check_branch
          %295 = sbr.rel (%p293) target = $region40
        $region39: #{tpu_custom_call.1} parent=31 // pred_region
          %296 = dma.done %s289, 256
        $region40: #{tpu_custom_call.1} parent=31 // pred_fallthru
          _
        %s297 = sand.u32 %s23, 1
        %s298 = scalar_lea.sflag [#allocation6], %s297
        %s299 = sand.u32 %s130, 1
        %s300 = smul.addr %s299, 16
        %s301 = scalar_lea.vmem [#allocation7], %s300
        // Predicated region
        $region41: #{tpu_custom_call.1} parent=31 // pred_check
          %p302 = pneg %p143
        $region42: #{tpu_custom_call.1} parent=31 // pred_check_branch
          %304 = sbr.rel (%p302) target = $region44
        $region43: #{tpu_custom_call.1} parent=31 // pred_region
          %305 = dma.done %s298, 256
        $region44: #{tpu_custom_call.1} parent=31 // pred_fallthru
          _
        %s306 = sand.u32 %s54, 1
        %s307 = scalar_lea.sflag [#allocation3], %s306
        %s308 = sand.u32 %s54, 1
        %s309 = smul.addr %s308, 96
        %s310 = scalar_lea.vmem [#allocation2], %s309
        %p311 = pneg %p67
        %p312 = pneg %p64
        %s313 = sand.u32 %s23, 1
        %s314 = scalar_lea.sflag [#allocation6], %s313
        %s315 = sand.u32 %s92, 1
        %s316 = smul.addr %s315, 16
        %s317 = scalar_lea.vmem [#allocation5], %s316
        %p318 = pneg %p105
        %p319 = pneg %p102
        %s320 = sand.u32 %s23, 1
        %s321 = scalar_lea.sflag [#allocation6], %s320
        %s322 = sand.u32 %s130, 1
        %s323 = smul.addr %s322, 16
        %s324 = scalar_lea.vmem [#allocation7], %s323
        %p325 = pneg %p143
        %p326 = pneg %p140
        %p327 = pneg %p173
        %p328 = pneg %p170
        %s329 = sand.u32 %s160, 1
        %s330 = scalar_lea.sflag [#allocation4], %s329
        %s331 = sand.u32 %s160, 1
        %s332 = smul.addr %s331, 96
        %s333 = scalar_lea.vmem [#allocation8], %s332
        %s334 = smul.u32 12, %s30
        %s335 = smul.u32 %s30, 6
        %s336 = ssub.s32 %s335, 1
        %p337 = scmp.gt.s32.totalorder %s336, 0
        %s338 = scalar_select %p337, %s336, 0
        %s339 = smul.u32 2, %s338
        %s340 = sadd.s32 %s30, 1
        %s341 = smul.u32 %s340, 6
        %p342 = scmp.lt.s32.totalorder %s341, 5
        %s343 = scalar_select %p342, %s341, 5
        %s344 = smul.u32 2, %s343
        %s345 = smul.u32 12, %s30
        %p346 = scmp.eq.s32.totalorder %s30, 0
        %v347 = vld [vmem:[%s283] sm:$0xff]
        %v348 = vld [vmem:[%s283 + $0x8] sm:$0xff]
        %v349 = vld [vmem:[%s283 + $0x10] sm:$0xff]
        %v350 = vld [vmem:[%s283 + $0x18] sm:$0xff]
        %v351 = vld [vmem:[%s283 + $0x20] sm:$0xff]
        %v352 = vld [vmem:[%s283 + $0x28] sm:$0xff]
        %v353 = vld [vmem:[%s283 + $0x30] sm:$0xff]
        %v354 = vld [vmem:[%s283 + $0x38] sm:$0xff]
        %v355 = vld [vmem:[%s283 + $0x40] sm:$0xff]
        %v356 = vld [vmem:[%s283 + $0x1] sm:$0xff]
        %v357 = vld [vmem:[%s283 + $0x9] sm:$0xff]
        %v358 = vld [vmem:[%s283 + $0x11] sm:$0xff]
        %v359 = vld [vmem:[%s283 + $0x19] sm:$0xff]
        %v360 = vld [vmem:[%s283 + $0x21] sm:$0xff]
        %v361 = vld [vmem:[%s283 + $0x29] sm:$0xff]
        %v362 = vld [vmem:[%s283 + $0x31] sm:$0xff]
        %v363 = vld [vmem:[%s283 + $0x39] sm:$0xff]
        %v364 = vld [vmem:[%s283 + $0x41] sm:$0xff]
        %v365 = vadd.f32 %v347, %v356
        %v366 = vadd.f32 %v348, %v357
        %v367 = vadd.f32 %v349, %v358
        %v368 = vadd.f32 %v350, %v359
        %v369 = vadd.f32 %v351, %v360
        %v370 = vadd.f32 %v352, %v361
        %v371 = vadd.f32 %v353, %v362
        %v372 = vadd.f32 %v354, %v363
        %v373 = vadd.f32 %v355, %v364
        %v374 = vld [vmem:[%s283 + $0x2] sm:$0xff]
        %v375 = vld [vmem:[%s283 + $0xa] sm:$0xff]
        %v376 = vld [vmem:[%s283 + $0x12] sm:$0xff]
        %v377 = vld [vmem:[%s283 + $0x1a] sm:$0xff]
        %v378 = vld [vmem:[%s283 + $0x22] sm:$0xff]
        %v379 = vld [vmem:[%s283 + $0x2a] sm:$0xff]
        %v380 = vld [vmem:[%s283 + $0x32] sm:$0xff]
        %v381 = vld [vmem:[%s283 + $0x3a] sm:$0xff]
        %v382 = vld [vmem:[%s283 + $0x42] sm:$0xff]
        %v383 = vld [vmem:[%s283 + $0x3] sm:$0xff]
        %v384 = vld [vmem:[%s283 + $0xb] sm:$0xff]
        %v385 = vld [vmem:[%s283 + $0x13] sm:$0xff]
        %v386 = vld [vmem:[%s283 + $0x1b] sm:$0xff]
        %v387 = vld [vmem:[%s283 + $0x23] sm:$0xff]
        %v388 = vld [vmem:[%s283 + $0x2b] sm:$0xff]
        %v389 = vld [vmem:[%s283 + $0x33] sm:$0xff]
        %v390 = vld [vmem:[%s283 + $0x3b] sm:$0xff]
        %v391 = vld [vmem:[%s283 + $0x43] sm:$0xff]
        %v392 = vadd.f32 %v374, %v383
        %v393 = vadd.f32 %v375, %v384
        %v394 = vadd.f32 %v376, %v385
        %v395 = vadd.f32 %v377, %v386
        %v396 = vadd.f32 %v378, %v387
        %v397 = vadd.f32 %v379, %v388
        %v398 = vadd.f32 %v380, %v389
        %v399 = vadd.f32 %v381, %v390
        %v400 = vadd.f32 %v382, %v391
        %v401 = vadd.f32 %v365, %v392
        %v402 = vadd.f32 %v366, %v393
        %v403 = vadd.f32 %v367, %v394
        %v404 = vadd.f32 %v368, %v395
        %v405 = vadd.f32 %v369, %v396
        %v406 = vadd.f32 %v370, %v397
        %v407 = vadd.f32 %v371, %v398
        %v408 = vadd.f32 %v372, %v399
        %v409 = vadd.f32 %v373, %v400
        %v410 = vld [vmem:[%s283 + $0x4] sm:$0xff]
        %v411 = vld [vmem:[%s283 + $0xc] sm:$0xff]
        %v412 = vld [vmem:[%s283 + $0x14] sm:$0xff]
        %v413 = vld [vmem:[%s283 + $0x1c] sm:$0xff]
        %v414 = vld [vmem:[%s283 + $0x24] sm:$0xff]
        %v415 = vld [vmem:[%s283 + $0x2c] sm:$0xff]
        %v416 = vld [vmem:[%s283 + $0x34] sm:$0xff]
        %v417 = vld [vmem:[%s283 + $0x3c] sm:$0xff]
        %v418 = vld [vmem:[%s283 + $0x44] sm:$0xff]
        %v419 = vld [vmem:[%s283 + $0x5] sm:$0xff]
        %v420 = vld [vmem:[%s283 + $0xd] sm:$0xff]
        %v421 = vld [vmem:[%s283 + $0x15] sm:$0xff]
        %v422 = vld [vmem:[%s283 + $0x1d] sm:$0xff]
        %v423 = vld [vmem:[%s283 + $0x25] sm:$0xff]
        %v424 = vld [vmem:[%s283 + $0x2d] sm:$0xff]
        %v425 = vld [vmem:[%s283 + $0x35] sm:$0xff]
        %v426 = vld [vmem:[%s283 + $0x3d] sm:$0xff]
        %v427 = vld [vmem:[%s283 + $0x45] sm:$0xff]
        %v428 = vadd.f32 %v410, %v419
        %v429 = vadd.f32 %v411, %v420
        %v430 = vadd.f32 %v412, %v421
        %v431 = vadd.f32 %v413, %v422
        %v432 = vadd.f32 %v414, %v423
        %v433 = vadd.f32 %v415, %v424
        %v434 = vadd.f32 %v416, %v425
        %v435 = vadd.f32 %v417, %v426
        %v436 = vadd.f32 %v418, %v427
        %v437 = vadd.f32 %v401, %v428
        %v438 = vadd.f32 %v402, %v429
        %v439 = vadd.f32 %v403, %v430
        %v440 = vadd.f32 %v404, %v431
        %v441 = vadd.f32 %v405, %v432
        %v442 = vadd.f32 %v406, %v433
        %v443 = vadd.f32 %v407, %v434
        %v444 = vadd.f32 %v408, %v435
        %v445 = vadd.f32 %v409, %v436
        %v446 = vld [vmem:[%s283 + $0x6] sm:$0xff]
        %v447 = vld [vmem:[%s283 + $0xe] sm:$0xff]
        %v448 = vld [vmem:[%s283 + $0x16] sm:$0xff]
        %v449 = vld [vmem:[%s283 + $0x1e] sm:$0xff]
        %v450 = vld [vmem:[%s283 + $0x26] sm:$0xff]
        %v451 = vld [vmem:[%s283 + $0x2e] sm:$0xff]
        %v452 = vld [vmem:[%s283 + $0x36] sm:$0xff]
        %v453 = vld [vmem:[%s283 + $0x3e] sm:$0xff]
        %v454 = vld [vmem:[%s283 + $0x46] sm:$0xff]
        %v455 = vld [vmem:[%s283 + $0x7] sm:$0xff]
        %v456 = vld [vmem:[%s283 + $0xf] sm:$0xff]
        %v457 = vld [vmem:[%s283 + $0x17] sm:$0xff]
        %v458 = vld [vmem:[%s283 + $0x1f] sm:$0xff]
        %v459 = vld [vmem:[%s283 + $0x27] sm:$0xff]
        %v460 = vld [vmem:[%s283 + $0x2f] sm:$0xff]
        %v461 = vld [vmem:[%s283 + $0x37] sm:$0xff]
        %v462 = vld [vmem:[%s283 + $0x3f] sm:$0xff]
        %v463 = vld [vmem:[%s283 + $0x47] sm:$0xff]
        %v464 = vadd.f32 %v446, %v455
        %v465 = vadd.f32 %v447, %v456
        %v466 = vadd.f32 %v448, %v457
        %v467 = vadd.f32 %v449, %v458
        %v468 = vadd.f32 %v450, %v459
        %v469 = vadd.f32 %v451, %v460
        %v470 = vadd.f32 %v452, %v461
        %v471 = vadd.f32 %v453, %v462
        %v472 = vadd.f32 %v454, %v463
        %v473 = vadd.f32 %v437, %v464
        %v474 = vadd.f32 %v438, %v465
        %v475 = vadd.f32 %v439, %v466
        %v476 = vadd.f32 %v440, %v467
        %v477 = vadd.f32 %v441, %v468
        %v478 = vadd.f32 %v442, %v469
        %v479 = vadd.f32 %v443, %v470
        %v480 = vadd.f32 %v444, %v471
        %v481 = vadd.f32 %v445, %v472
        %v482 = vld [vmem:[%s283 + $0x48] sm:$0xff]
        %v483 = vld [vmem:[%s283 + $0x49] sm:$0xff]
        %v484 = vadd.f32 %v482, %v483
        %v485 = vadd.f32 %v473, %v366
        %v486 = vadd.f32 %v474, %v367
        %v487 = vadd.f32 %v475, %v368
        %v488 = vadd.f32 %v476, %v369
        %v489 = vadd.f32 %v477, %v370
        %v490 = vadd.f32 %v478, %v371
        %v491 = vadd.f32 %v479, %v372
        %v492 = vadd.f32 %v480, %v373
        %v493 = vadd.f32 %v481, %v484
        %v494 = vld [vmem:[%s283 + $0x4a] sm:$0xff]
        %v495 = vld [vmem:[%s283 + $0x4b] sm:$0xff]
        %v496 = vadd.f32 %v494, %v495
        %v497 = vadd.f32 %v485, %v393
        %v498 = vadd.f32 %v486, %v394
        %v499 = vadd.f32 %v487, %v395
        %v500 = vadd.f32 %v488, %v396
        %v501 = vadd.f32 %v489, %v397
        %v502 = vadd.f32 %v490, %v398
        %v503 = vadd.f32 %v491, %v399
        %v504 = vadd.f32 %v492, %v400
        %v505 = vadd.f32 %v493, %v496
        %v506 = vld [vmem:[%s283 + $0x4c] sm:$0xff]
        %v507 = vld [vmem:[%s283 + $0x4d] sm:$0xff]
        %v508 = vadd.f32 %v506, %v507
        %v509 = vadd.f32 %v497, %v429
        %v510 = vadd.f32 %v498, %v430
        %v511 = vadd.f32 %v499, %v431
        %v512 = vadd.f32 %v500, %v432
        %v513 = vadd.f32 %v501, %v433
        %v514 = vadd.f32 %v502, %v434
        %v515 = vadd.f32 %v503, %v435
        %v516 = vadd.f32 %v504, %v436
        %v517 = vadd.f32 %v505, %v508
        %v518 = vld [vmem:[%s283 + $0x4e] sm:$0xff]
        %v519 = vld [vmem:[%s283 + $0x4f] sm:$0xff]
        %v520 = vadd.f32 %v518, %v519
        %v521 = vadd.f32 %v509, %v465
        %v522 = vadd.f32 %v510, %v466
        %v523 = vadd.f32 %v511, %v467
        %v524 = vadd.f32 %v512, %v468
        %v525 = vadd.f32 %v513, %v469
        %v526 = vadd.f32 %v514, %v470
        %v527 = vadd.f32 %v515, %v471
        %v528 = vadd.f32 %v516, %v472
        %v529 = vadd.f32 %v517, %v520
        %v530 = vld [vmem:[%s283 + $0x50] sm:$0xff]
        %v531 = vld [vmem:[%s283 + $0x51] sm:$0xff]
        %v532 = vadd.f32 %v530, %v531
        %v533 = vadd.f32 %v521, %v367
        %v534 = vadd.f32 %v522, %v368
        %v535 = vadd.f32 %v523, %v369
        %v536 = vadd.f32 %v524, %v370
        %v537 = vadd.f32 %v525, %v371
        %v538 = vadd.f32 %v526, %v372
        %v539 = vadd.f32 %v527, %v373
        %v540 = vadd.f32 %v528, %v484
        %v541 = vadd.f32 %v529, %v532
        %v542 = vld [vmem:[%s283 + $0x52] sm:$0xff]
        %v543 = vld [vmem:[%s283 + $0x53] sm:$0xff]
        %v544 = vadd.f32 %v542, %v543
        %v545 = vadd.f32 %v533, %v394
        %v546 = vadd.f32 %v534, %v395
        %v547 = vadd.f32 %v535, %v396
        %v548 = vadd.f32 %v536, %v397
        %v549 = vadd.f32 %v537, %v398
        %v550 = vadd.f32 %v538, %v399
        %v551 = vadd.f32 %v539, %v400
        %v552 = vadd.f32 %v540, %v496
        %v553 = vadd.f32 %v541, %v544
        %v554 = vld [vmem:[%s283 + $0x54] sm:$0xff]
        %v555 = vld [vmem:[%s283 + $0x55] sm:$0xff]
        %v556 = vadd.f32 %v554, %v555
        %v557 = vadd.f32 %v545, %v430
        %v558 = vadd.f32 %v546, %v431
        %v559 = vadd.f32 %v547, %v432
        %v560 = vadd.f32 %v548, %v433
        %v561 = vadd.f32 %v549, %v434
        %v562 = vadd.f32 %v550, %v435
        %v563 = vadd.f32 %v551, %v436
        %v564 = vadd.f32 %v552, %v508
        %v565 = vadd.f32 %v553, %v556
        %v566 = vld [vmem:[%s283 + $0x56] sm:$0xff]
        %v567 = vld [vmem:[%s283 + $0x57] sm:$0xff]
        %v568 = vadd.f32 %v566, %v567
        %v569 = vadd.f32 %v557, %v466
        %v570 = vadd.f32 %v558, %v467
        %v571 = vadd.f32 %v559, %v468
        %v572 = vadd.f32 %v560, %v469
        %v573 = vadd.f32 %v561, %v470
        %v574 = vadd.f32 %v562, %v471
        %v575 = vadd.f32 %v563, %v472
        %v576 = vadd.f32 %v564, %v520
        %v577 = vadd.f32 %v565, %v568
        %v578 = vld [vmem:[%s283 + $0x18] sm:$0xff]
        %v579 = vld [vmem:[%s283 + $0x20] sm:$0xff]
        %v580 = vld [vmem:[%s283 + $0x28] sm:$0xff]
        %v581 = vld [vmem:[%s283 + $0x30] sm:$0xff]
        %v582 = vld [vmem:[%s283 + $0x38] sm:$0xff]
        %v583 = vld [vmem:[%s283 + $0x40] sm:$0xff]
        %v584 = vld [vmem:[%s283 + $0x48] sm:$0xff]
        %v585 = vld [vmem:[%s283 + $0x50] sm:$0xff]
        %v586 = vld [vmem:[%s283 + $0x58] sm:$0xff]
        %v587 = vadd.f32 %v569, %v578
        %v588 = vadd.f32 %v570, %v579
        %v589 = vadd.f32 %v571, %v580
        %v590 = vadd.f32 %v572, %v581
        %v591 = vadd.f32 %v573, %v582
        %v592 = vadd.f32 %v574, %v583
        %v593 = vadd.f32 %v575, %v584
        %v594 = vadd.f32 %v576, %v585
        %v595 = vadd.f32 %v577, %v586
        %v596 = vmul.f32 %v587, 0.04
        %v597 = vmul.f32 %v588, 0.04
        %v598 = vmul.f32 %v589, 0.04
        %v599 = vmul.f32 %v590, 0.04
        %v600 = vmul.f32 %v591, 0.04
        %v601 = vmul.f32 %v592, 0.04
        %v602 = vmul.f32 %v593, 0.04
        %v603 = vmul.f32 %v594, 0.04
        %v604 = vmul.f32 %v595, 0.04
        %605 = vst [vmem:[%s333 + $0xc] sm:$0xff] %v596
        %606 = vst [vmem:[%s333 + $0x14] sm:$0xff] %v597
        %607 = vst [vmem:[%s333 + $0x1c] sm:$0xff] %v598
        %608 = vst [vmem:[%s333 + $0x24] sm:$0xff] %v599
        %609 = vst [vmem:[%s333 + $0x2c] sm:$0xff] %v600
        %610 = vst [vmem:[%s333 + $0x34] sm:$0xff] %v601
        %611 = vst [vmem:[%s333 + $0x3c] sm:$0xff] %v602
        %612 = vst [vmem:[%s333 + $0x44] sm:$0xff] %v603
        %613 = vst [vmem:[%s333 + $0x4c] sm:$0xff] %v604
        %v614 = vld [vmem:[%s283] sm:$0x1]
        %v615 = vld [vmem:[%s283] sm:$0xff]
        %v616 = vld [vmem:[%s283 + $0x8] sm:$0x1f]
        %vm617 = vcmask 1044480
        %v618 = vsel %vm617, %v616, 0.0
        %v619 = vadd.f32 %v615, %v618
        %v620 = vrot.slane %v619, 4
        %v621 = vadd.f32 %v619, %v620
        %v622 = vrot.slane %v621, 2
        %v623 = vadd.f32 %v621, %v622
        %v624 = vrot.slane %v623, 1
        %v625 = vadd.f32 %v623, %v624
        %v626 = vld [vmem:[%s292 + $0x4] sm:$0xff]
        %v627 = vld [vmem:[%s292 + $0xc] sm:$0xf]
        %vm628 = vcmask 1043456
        %v629 = vsel %vm628, %v627, 0.0
        %v630 = vadd.f32 %v626, %v629
        %v631 = vrot.slane %v630, 4
        %v632 = vadd.f32 %v630, %v631
        %v633 = vrot.slane %v632, 2
        %v634 = vadd.f32 %v632, %v633
        %v635 = vrot.slane %v634, 1
        %v636 = vadd.f32 %v634, %v635
        %v637 = vmul.f32 %v614, 12.0
        %s638 = scalar_select %p346, 1, 0
        %v639 = vstv %s638
        %vm640 = vcmp.eq.s32.totalorder %v639, 1
        %v641 = vsel %vm640, %v637, %v636
        %v642 = vadd.f32 %v625, %v641
        %v643 = vmul.f32 %v642, 0.04
        %644 = vst [vmem:[%s333] sm:$0x1] %v643
        %v645 = vld [vmem:[%s283 + $0xd] sm:$0x1]
        %v646 = vadd.f32 %v625, %v645
        %v647 = vld [vmem:[%s292 + $0x4] sm:$0x1]
        %v648 = vsub.f32 %v636, %v647
        %v649 = vmul.f32 %v614, 11.0
        %v650 = vsel %vm640, %v649, %v648
        %v651 = vadd.f32 %v646, %v650
        %v652 = vmul.f32 %v651, 0.04
        %653 = vst [vmem:[%s333 + $0x1] sm:$0x1] %v652
        %v654 = vld [vmem:[%s283 + $0xe] sm:$0x1]
        %v655 = vadd.f32 %v646, %v654
        %v656 = vld [vmem:[%s292 + $0x5] sm:$0x1]
        %v657 = vsub.f32 %v648, %v656
        %v658 = vmul.f32 %v614, 10.0
        %v659 = vsel %vm640, %v658, %v657
        %v660 = vadd.f32 %v655, %v659
        %v661 = vmul.f32 %v660, 0.04
        %662 = vst [vmem:[%s333 + $0x2] sm:$0x1] %v661
        %v663 = vld [vmem:[%s283 + $0xf] sm:$0x1]
        %v664 = vadd.f32 %v655, %v663
        %v665 = vld [vmem:[%s292 + $0x6] sm:$0x1]
        %v666 = vsub.f32 %v657, %v665
        %v667 = vmul.f32 %v614, 9.0
        %v668 = vsel %vm640, %v667, %v666
        %v669 = vadd.f32 %v664, %v668
        %v670 = vmul.f32 %v669, 0.04
        %671 = vst [vmem:[%s333 + $0x3] sm:$0x1] %v670
        %v672 = vld [vmem:[%s283 + $0x10] sm:$0x1]
        %v673 = vadd.f32 %v664, %v672
        %v674 = vld [vmem:[%s292 + $0x7] sm:$0x1]
        %v675 = vsub.f32 %v666, %v674
        %v676 = vmul.f32 %v614, 8.0
        %v677 = vsel %vm640, %v676, %v675
        %v678 = vadd.f32 %v673, %v677
        %v679 = vmul.f32 %v678, 0.04
        %680 = vst [vmem:[%s333 + $0x4] sm:$0x1] %v679
        %v681 = vld [vmem:[%s283 + $0x11] sm:$0x1]
        %v682 = vadd.f32 %v673, %v681
        %v683 = vld [vmem:[%s292 + $0x8] sm:$0x1]
        %v684 = vsub.f32 %v675, %v683
        %v685 = vmul.f32 %v614, 7.0
        %v686 = vsel %vm640, %v685, %v684
        %v687 = vadd.f32 %v682, %v686
        %v688 = vmul.f32 %v687, 0.04
        %689 = vst [vmem:[%s333 + $0x5] sm:$0x1] %v688
        %v690 = vld [vmem:[%s283 + $0x12] sm:$0x1]
        %v691 = vadd.f32 %v682, %v690
        %v692 = vld [vmem:[%s292 + $0x9] sm:$0x1]
        %v693 = vsub.f32 %v684, %v692
        %v694 = vmul.f32 %v614, 6.0
        %v695 = vsel %vm640, %v694, %v693
        %v696 = vadd.f32 %v691, %v695
        %v697 = vmul.f32 %v696, 0.04
        %698 = vst [vmem:[%s333 + $0x6] sm:$0x1] %v697
        %v699 = vld [vmem:[%s283 + $0x13] sm:$0x1]
        %v700 = vadd.f32 %v691, %v699
        %v701 = vld [vmem:[%s292 + $0xa] sm:$0x1]
        %v702 = vsub.f32 %v693, %v701
        %v703 = vmul.f32 %v614, 5.0
        %v704 = vsel %vm640, %v703, %v702
        %v705 = vadd.f32 %v700, %v704
        %v706 = vmul.f32 %v705, 0.04
        %707 = vst [vmem:[%s333 + $0x7] sm:$0x1] %v706
        %v708 = vld [vmem:[%s283 + $0x14] sm:$0x1]
        %v709 = vadd.f32 %v700, %v708
        %v710 = vld [vmem:[%s292 + $0xb] sm:$0x1]
        %v711 = vsub.f32 %v702, %v710
        %v712 = vmul.f32 %v614, 4.0
        %v713 = vsel %vm640, %v712, %v711
        %v714 = vadd.f32 %v709, %v713
        %v715 = vmul.f32 %v714, 0.04
        %716 = vst [vmem:[%s333 + $0x8] sm:$0x1] %v715
        %v717 = vld [vmem:[%s283 + $0x15] sm:$0x1]
        %v718 = vadd.f32 %v709, %v717
        %v719 = vld [vmem:[%s292 + $0xc] sm:$0x1]
        %v720 = vsub.f32 %v711, %v719
        %v721 = vmul.f32 %v614, 3.0
        %v722 = vsel %vm640, %v721, %v720
        %v723 = vadd.f32 %v718, %v722
        %v724 = vmul.f32 %v723, 0.04
        %725 = vst [vmem:[%s333 + $0x9] sm:$0x1] %v724
        %v726 = vld [vmem:[%s283 + $0x16] sm:$0x1]
        %v727 = vadd.f32 %v718, %v726
        %v728 = vld [vmem:[%s292 + $0xd] sm:$0x1]
        %v729 = vsub.f32 %v720, %v728
        %v730 = vmul.f32 %v614, 2.0
        %v731 = vsel %vm640, %v730, %v729
        %v732 = vadd.f32 %v727, %v731
        %v733 = vmul.f32 %v732, 0.04
        %734 = vst [vmem:[%s333 + $0xa] sm:$0x1] %v733
        %v735 = vld [vmem:[%s283 + $0x17] sm:$0x1]
        %v736 = vadd.f32 %v727, %v735
        %v737 = vld [vmem:[%s292 + $0xe] sm:$0x1]
        %v738 = vsub.f32 %v729, %v737
        %v739 = vsel %vm640, %v614, %v738
        %v740 = vadd.f32 %v736, %v739
        %v741 = vmul.f32 %v740, 0.04
        %742 = vst [vmem:[%s333 + $0xb] sm:$0x1] %v741
        %v743 = vld [vmem:[%s283 + $0x5f] sm:$0x1]
        %v744 = vld [vmem:[%s283 + $0x48] sm:$0xff]
        %v745 = vld [vmem:[%s283 + $0x50] sm:$0xff]
        %v746 = vld [vmem:[%s283 + $0x58] sm:$0xff]
        %v747 = vadd.f32 %v744, %v745
        %v748 = vadd.f32 %v747, %v746
        %v749 = vrot.slane %v748, 4
        %v750 = vadd.f32 %v748, %v749
        %v751 = vrot.slane %v750, 2
        %v752 = vadd.f32 %v750, %v751
        %v753 = vrot.slane %v752, 1
        %v754 = vadd.f32 %v752, %v753
        %v755 = vld [vmem:[%s301] sm:$0x1]
        %v756 = vsel %vm640, %v743, %v755
        %v757 = vadd.f32 %v754, %v756
        %v758 = vmul.f32 %v757, 0.04
        %759 = vst [vmem:[%s333 + $0x54] sm:$0x1] %v758
        %v760 = vld [vmem:[%s283 + $0x48] sm:$0x1]
        %v761 = vsub.f32 %v754, %v760
        %v762 = vld [vmem:[%s301 + $0x1] sm:$0x1]
        %v763 = vadd.f32 %v755, %v762
        %v764 = vmul.f32 %v743, 2.0
        %v765 = vsel %vm640, %v764, %v763
        %v766 = vadd.f32 %v761, %v765
        %v767 = vmul.f32 %v766, 0.04
        %768 = vst [vmem:[%s333 + $0x55] sm:$0x1] %v767
        %v769 = vld [vmem:[%s283 + $0x49] sm:$0x1]
        %v770 = vsub.f32 %v761, %v769
        %v771 = vld [vmem:[%s301 + $0x2] sm:$0x1]
        %v772 = vadd.f32 %v763, %v771
        %v773 = vmul.f32 %v743, 3.0
        %v774 = vsel %vm640, %v773, %v772
        %v775 = vadd.f32 %v770, %v774
        %v776 = vmul.f32 %v775, 0.04
        %777 = vst [vmem:[%s333 + $0x56] sm:$0x1] %v776
        %v778 = vld [vmem:[%s283 + $0x4a] sm:$0x1]
        %v779 = vsub.f32 %v770, %v778
        %v780 = vld [vmem:[%s301 + $0x3] sm:$0x1]
        %v781 = vadd.f32 %v772, %v780
        %v782 = vmul.f32 %v743, 4.0
        %v783 = vsel %vm640, %v782, %v781
        %v784 = vadd.f32 %v779, %v783
        %v785 = vmul.f32 %v784, 0.04
        %786 = vst [vmem:[%s333 + $0x57] sm:$0x1] %v785
        %v787 = vld [vmem:[%s283 + $0x4b] sm:$0x1]
        %v788 = vsub.f32 %v779, %v787
        %v789 = vld [vmem:[%s301 + $0x4] sm:$0x1]
        %v790 = vadd.f32 %v781, %v789
        %v791 = vmul.f32 %v743, 5.0
        %v792 = vsel %vm640, %v791, %v790
        %v793 = vadd.f32 %v788, %v792
        %v794 = vmul.f32 %v793, 0.04
        %795 = vst [vmem:[%s333 + $0x58] sm:$0x1] %v794
        %v796 = vld [vmem:[%s283 + $0x4c] sm:$0x1]
        %v797 = vsub.f32 %v788, %v796
        %v798 = vld [vmem:[%s301 + $0x5] sm:$0x1]
        %v799 = vadd.f32 %v790, %v798
        %v800 = vmul.f32 %v743, 6.0
        %v801 = vsel %vm640, %v800, %v799
        %v802 = vadd.f32 %v797, %v801
        %v803 = vmul.f32 %v802, 0.04
        %804 = vst [vmem:[%s333 + $0x59] sm:$0x1] %v803
        %v805 = vld [vmem:[%s283 + $0x4d] sm:$0x1]
        %v806 = vsub.f32 %v797, %v805
        %v807 = vld [vmem:[%s301 + $0x6] sm:$0x1]
        %v808 = vadd.f32 %v799, %v807
        %v809 = vmul.f32 %v743, 7.0
        %v810 = vsel %vm640, %v809, %v808
        %v811 = vadd.f32 %v806, %v810
        %v812 = vmul.f32 %v811, 0.04
        %813 = vst [vmem:[%s333 + $0x5a] sm:$0x1] %v812
        %v814 = vld [vmem:[%s283 + $0x4e] sm:$0x1]
        %v815 = vsub.f32 %v806, %v814
        %v816 = vld [vmem:[%s301 + $0x7] sm:$0x1]
        %v817 = vadd.f32 %v808, %v816
        %v818 = vmul.f32 %v743, 8.0
        %v819 = vsel %vm640, %v818, %v817
        %v820 = vadd.f32 %v815, %v819
        %v821 = vmul.f32 %v820, 0.04
        %822 = vst [vmem:[%s333 + $0x5b] sm:$0x1] %v821
        %v823 = vld [vmem:[%s283 + $0x4f] sm:$0x1]
        %v824 = vsub.f32 %v815, %v823
        %v825 = vld [vmem:[%s301 + $0x8] sm:$0x1]
        %v826 = vadd.f32 %v817, %v825
        %v827 = vmul.f32 %v743, 9.0
        %v828 = vsel %vm640, %v827, %v826
        %v829 = vadd.f32 %v824, %v828
        %v830 = vmul.f32 %v829, 0.04
        %831 = vst [vmem:[%s333 + $0x5c] sm:$0x1] %v830
        %v832 = vld [vmem:[%s283 + $0x50] sm:$0x1]
        %v833 = vsub.f32 %v824, %v832
        %v834 = vld [vmem:[%s301 + $0x9] sm:$0x1]
        %v835 = vadd.f32 %v826, %v834
        %v836 = vmul.f32 %v743, 10.0
        %v837 = vsel %vm640, %v836, %v835
        %v838 = vadd.f32 %v833, %v837
        %v839 = vmul.f32 %v838, 0.04
        %840 = vst [vmem:[%s333 + $0x5d] sm:$0x1] %v839
        %v841 = vld [vmem:[%s283 + $0x51] sm:$0x1]
        %v842 = vsub.f32 %v833, %v841
        %v843 = vld [vmem:[%s301 + $0xa] sm:$0x1]
        %v844 = vadd.f32 %v835, %v843
        %v845 = vmul.f32 %v743, 11.0
        %v846 = vsel %vm640, %v845, %v844
        %v847 = vadd.f32 %v842, %v846
        %v848 = vmul.f32 %v847, 0.04
        %849 = vst [vmem:[%s333 + $0x5e] sm:$0x1] %v848
        %v850 = vld [vmem:[%s283 + $0x52] sm:$0x1]
        %v851 = vsub.f32 %v842, %v850
        %v852 = vld [vmem:[%s301 + $0xb] sm:$0x1]
        %v853 = vadd.f32 %v844, %v852
        %v854 = vmul.f32 %v743, 12.0
        %v855 = vsel %vm640, %v854, %v853
        %v856 = vadd.f32 %v851, %v855
        %v857 = vmul.f32 %v856, 0.04
        %858 = vst [vmem:[%s333 + $0x5f] sm:$0x1] %v857
        %s859 = sand.u32 %s160, 1
        %s860 = scalar_lea.sflag [#allocation4], %s859
        %s861 = sand.u32 %s160, 1
        %s862 = smul.addr %s861, 96
        %s863 = scalar_lea.vmem [#allocation8], %s862
        // Predicated region
        $region45: #{tpu_custom_call.1} parent=31 // pred_check
          %p864 = pneg %p170
        $region46: #{tpu_custom_call.1} parent=31 // pred_check_branch
          %866 = sbr.rel (%p864) target = $region48
        $region47: #{tpu_custom_call.1} parent=31 // pred_region
          %s867 = smul.u32 12, %s30
          %s869 = ssub.s32 1536, 1536
          %870 = vsyncadd %s860, %s869
          %s871 = sadd.s32 %s29, %s867
          %s872 = smul.addr %s28, 12
          %s873 = sadd.s32 %s871, %s872
          %s874 = smul.addr %s873, 128
          %s875 = scalar_lea.hbm %s3, %s874
          %s876 = sshll.u32 %s863, 4
          %s877 = int_to_ptr.vmem [resolvable:$true] %s876
          %882 = dma.vmem_to_hbm [thread:$0]  %s877, 1536, %s875, %s860, 128, 128, 8
        $region48: #{tpu_custom_call.1} parent=31 // pred_fallthru
          _
      $region32: #{tpu_custom_call.1} parent=5 // pred_fallthru
        _
      %p883 = scmp.le.s32.totalorder 2, %s18
      // Predicated region
      $region49: #{tpu_custom_call.1} parent=5 // pred_check
        %p884 = pneg %p883
      $region50: #{tpu_custom_call.1} parent=5 // pred_check_branch
        %886 = sbr.rel (%p884) target = $region52
      $region51: #{tpu_custom_call.1} parent=5 // pred_region
        %s887 = ssub.s32 %s18, 2
        // Predicated region
        $region53: #{tpu_custom_call.1} parent=51 // pred_check
          %p888 = pneg %p176
        $region54: #{tpu_custom_call.1} parent=51 // pred_check_branch
          %890 = sbr.rel (%p888) target = $region56
        $region55: #{tpu_custom_call.1} parent=51 // pred_region
          %s891 = sand.u32 %s161, 1
          %s892 = scalar_lea.sflag [#allocation4], %s891
          %s893 = sand.u32 %s161, 1
          %s894 = smul.addr %s893, 96
          %s895 = scalar_lea.vmem [#allocation8], %s894
          %896 = dma.done %s892, 1536
        $region56: #{tpu_custom_call.1} parent=51 // pred_fallthru
          _
      $region52: #{tpu_custom_call.1} parent=5 // pred_fallthru
        _
    $region6: #{tpu_custom_call.1} parent=1 // loop_footer
      %s22 = sadd.s32 1, %s18
    $region7: #{tpu_custom_call.1} parent=1 // loop_footer_branch
      %17 = sbr.rel target = $region3
    $region8: #{tpu_custom_call.1} parent=1 // loop_exit
      _
    %897 = vsyncpa [#allocation3], 1
    %s898 = scalar_lea.sflag [#allocation3], 1
    %899 = vsyncpa %s898, 1
    %900 = vsyncpa [#allocation6], 1
    %s901 = scalar_lea.sflag [#allocation6], 1
    %902 = vsyncpa %s901, 1
    %903 = vsyncpa [#allocation4], 1
    %s904 = scalar_lea.sflag [#allocation4], 1
    %905 = vsyncpa %s904, 1

</llo_original>
